<compile_context>
chip_gen: v7x
topology: tpu7x:2x2x1
jax: 0.10.0
libtpu: 0.0.40
codegen_flags: <defaults>
</compile_context>

<pallas_src>
import jax
import jax.numpy as jnp
from jax.experimental import pallas as pl
from jax.experimental.pallas import tpu as pltpu


# ----------------------------------------------------------------------------
# helpers
# ----------------------------------------------------------------------------
def _round_up(x, m):
    return (x + m - 1) // m * m


def _pick_row_tile(n_rows, n_outer, row_bytes, budget_bytes):
    """Rows per block: VMEM-budget bounded, a multiple of 8 (or all rows, which
    is always layout-legal), and small enough to leave >= ~8 total grid steps
    (software pipelining + both v7x TensorCores) when the problem allows."""
    cap = max(1, budget_bytes // max(1, row_bytes))
    steps_cap = max(1, (n_rows * n_outer) // 8)
    cap = min(cap, steps_cap)
    if cap >= n_rows:
        return n_rows
    if cap >= 8:
        return (cap // 8) * 8
    return min(8, n_rows)


# ----------------------------------------------------------------------------
# Pallas kernels
# ----------------------------------------------------------------------------
def _conv3x3s2_kernel(x_ref, wa_ref, wb_ref, b_ref, o_ref):
    # x : (toh, Ws, 6C)  lane-packed stencil columns (see wrapper)
    # wa: (6C, coutp)    taps with kx in {0,1}   (resident)
    # wb: (3C, coutp)    taps with kx == 2       (resident)
    # b : (1,  coutp)    bias, f32               (resident)
    # o : (toh*Wo, coutp) dense output rows, Wo = Ws - 1
    toh, Ws, c6 = x_ref.shape
    c3 = wb_ref.shape[0]
    Wo = Ws - 1
    coutp = o_ref.shape[-1]

    x = x_ref[...]

    # kx in {0,1}: all six taps in one K = 6C matmul over every packed column.
    acc_a = jnp.dot(x.reshape(toh * Ws, c6), wa_ref[...],
                    preferred_element_type=jnp.float32)
    acc_a = acc_a.reshape(toh, Ws, coutp)[:, :Wo, :].reshape(toh * Wo, coutp)

    # kx == 2: three taps read the *next* packed column's first 3C lanes.
    lhs_b = x[:, 1:, :c3].reshape(toh * Wo, c3)
    acc_b = jnp.dot(lhs_b, wb_ref[...], preferred_element_type=jnp.float32)

    o_ref[...] = (acc_a + acc_b + b_ref[...]).astype(o_ref.dtype)


def _avgpool2x2_kernel(x_ref, a_ref, o_ref):
    # x: (tr, 2W)  -- one 2-row band per output row, packed into lanes
    # a: (W, Wo)   -- constant 0.25 column-pair averaging matrix (resident)
    # o: (tr, Wo)
    W = a_ref.shape[0]
    v = x_ref[...]
    rows = v[:, :W] + v[:, W:]                      # vertical pair sum (VPU)
    o_ref[...] = jnp.dot(rows, a_ref[...],          # horizontal pair avg (MXU)
                         preferred_element_type=jnp.float32).astype(o_ref.dtype)


# ----------------------------------------------------------------------------
# Wrappers
# ----------------------------------------------------------------------------
def downsample_conv(x_nchw, w_oihw, bias):
    """pad=(0,1,0,1) + Conv2d(kernel=3, stride=2, padding=0)."""
    N, C, H, W = x_nchw.shape
    Cout = w_oihw.shape[0]
    dtype = x_nchw.dtype
    isz = jnp.dtype(dtype).itemsize
    Ho = (H - 2) // 2 + 1
    Wo = (W - 2) // 2 + 1
    Ws = Wo + 1
    coutp = _round_up(max(Cout, 128), 128)          # lane-dense output channels

    # --- glue (one fused XLA pass): NCHW -> NHWC, zero-pad bottom/right,
    # pack the 3x2 stencil columns into lanes:
    #   xs[n, oh, ws, k*C + c] = x_pad[n, 2*oh + r, 2*ws + p, c]
    # with k = 3*p + r, p in {0,1} (column phase), r in {0,1,2} (row offset).
    x = jnp.transpose(x_nchw, (0, 2, 3, 1))
    Hp, Wp = 2 * Ho + 2, 2 * Ws
    x = jnp.pad(x, ((0, 0), (0, Hp - H), (0, Wp - W), (0, 0)))
    c0 = x[:, :, 0::2, :]                           # even columns (N, Hp, Ws, C)
    c1 = x[:, :, 1::2, :]                           # odd  columns
    parts = []
    for cph in (c0, c1):
        for r in range(3):
            parts.append(cph[:, r:r + 2 * Ho:2])    # rows 2*oh + r  (N, Ho, Ws, C)
    xs = jnp.concatenate(parts, axis=-1)            # (N, Ho, Ws, 6C)

    # --- weights stacked along K to match the lane packing; bias in f32.
    wt = jnp.transpose(w_oihw, (1, 2, 3, 0))        # (C, 3, 3, Cout)
    taps_a = [(0, 0), (1, 0), (2, 0), (0, 1), (1, 1), (2, 1)]   # kx in {0,1}
    taps_b = [(0, 2), (1, 2), (2, 2)]                           # kx == 2
    wa = jnp.concatenate([wt[:, ky, kx, :] for ky, kx in taps_a], axis=0)
    wb = jnp.concatenate([wt[:, ky, kx, :] for ky, kx in taps_b], axis=0)
    wa = jnp.pad(wa, ((0, 0), (0, coutp - Cout)))   # (6C, coutp)
    wb = jnp.pad(wb, ((0, 0), (0, coutp - Cout)))   # (3C, coutp)
    b2 = jnp.pad(bias.reshape(1, Cout).astype(jnp.float32),
                 ((0, 0), (0, coutp - Cout)))       # (1, coutp)

    # --- tiling: row tile from a VMEM budget (input + output + f32 acc per row)
    row_bytes = Ws * 6 * C * isz + Wo * coutp * isz + Ws * coutp * 4
    toh = _pick_row_tile(Ho, N, row_bytes, 6 << 20)
    grid = (N, pl.cdiv(Ho, toh))

    in_blk = toh * Ws * 6 * C * isz
    out_blk = toh * Wo * coutp * isz
    wts_blk = (9 * C * coutp) * isz + coutp * 4
    acc_blk = toh * Ws * coutp * 4
    need = 2 * (in_blk + out_blk + wts_blk) + 3 * acc_blk + (4 << 20)
    vmem_limit = int(min(max(need, 32 << 20), 48 << 20))

    out = pl.pallas_call(
        _conv3x3s2_kernel,
        out_shape=jax.ShapeDtypeStruct((N, Ho * Wo, coutp), dtype),
        grid=grid,
        in_specs=[
            pl.BlockSpec((None, toh, Ws, 6 * C), lambda n, i: (n, i, 0, 0)),
            pl.BlockSpec((6 * C, coutp), lambda n, i: (0, 0)),   # resident
            pl.BlockSpec((3 * C, coutp), lambda n, i: (0, 0)),   # resident
            pl.BlockSpec((1, coutp), lambda n, i: (0, 0)),       # resident
        ],
        out_specs=pl.BlockSpec((None, toh * Wo, coutp), lambda n, i: (n, i, 0)),
        compiler_params=pltpu.CompilerParams(
            dimension_semantics=("parallel", "parallel"),
            vmem_limit_bytes=vmem_limit),
    )(xs, wa, wb, b2)

    out = out.reshape(N, Ho, Wo, coutp)[..., :Cout]  # drop lane padding (fused
    return jnp.transpose(out, (0, 3, 1, 2))          # into the NCHW transpose)


def downsample_avgpool(x_nchw):
    """avg_pool2d(kernel_size=2, stride=2); stays in NCHW end to end."""
    N, C, H, W = x_nchw.shape
    Ho, Wo = H // 2, W // 2
    dtype = x_nchw.dtype
    isz = jnp.dtype(dtype).itemsize

    xv = x_nchw
    if H != 2 * Ho:                                  # odd H: drop last row (rare)
        xv = xv[:, :, :2 * Ho, :]
    R = N * C * Ho
    xr = xv.reshape(R, 2 * W)                        # pure reshape: one 2-row band
                                                     # per output row, in lanes

    # constant column-pair averaging matrix; an odd trailing column of W is
    # simply never referenced.
    wo_idx = jnp.arange(Wo)
    a = jnp.zeros((W, Wo), dtype)
    a = a.at[2 * wo_idx, wo_idx].set(0.25)
    a = a.at[2 * wo_idx + 1, wo_idx].set(0.25)

    row_bytes = 2 * W * isz + Wo * isz + Wo * 4
    tr = _pick_row_tile(R, 1, row_bytes, 6 << 20)
    grid = (pl.cdiv(R, tr),)

    out = pl.pallas_call(
        _avgpool2x2_kernel,
        out_shape=jax.ShapeDtypeStruct((R, Wo), dtype),
        grid=grid,
        in_specs=[
            pl.BlockSpec((tr, 2 * W), lambda i: (i, 0)),
            pl.BlockSpec((W, Wo), lambda i: (0, 0)),             # resident
        ],
        out_specs=pl.BlockSpec((tr, Wo), lambda i: (i, 0)),
        compiler_params=pltpu.CompilerParams(
            dimension_semantics=("parallel",),
            vmem_limit_bytes=32 * 1024 * 1024),
    )(xr, a)

    return out.reshape(N, C, Ho, Wo)


def downsample(x_nchw, with_conv, params=None):
    if with_conv:
        return downsample_conv(x_nchw, params["w"], params["b"])
    return downsample_avgpool(x_nchw)


# ----------------------------------------------------------------------------
# Main
# ----------------------------------------------------------------------------
if __name__ == "__main__":
    key = jax.random.PRNGKey(0)
    kx, kw, kb = jax.random.split(key, 3)

    N, C, H, W = 2, 4, 16, 16
    x = jax.random.normal(kx, (N, C, H, W), dtype=jnp.float32)
    w = jax.random.normal(kw, (C, C, 3, 3), dtype=jnp.float32) * 0.1
    b = jax.random.normal(kb, (C,), dtype=jnp.float32) * 0.1

    conv_fn = jax.jit(downsample_conv)
    pool_fn = jax.jit(downsample_avgpool)

    # ---- with_conv = True: pad (0,1,0,1) + Conv2d(k=3, s=2, p=0) ----
    out_conv = jax.block_until_ready(conv_fn(x, w, b))
    assert out_conv.shape == (N, C, H // 2, W // 2), out_conv.shape
    x_pad = jnp.pad(x, ((0, 0), (0, 0), (0, 1), (0, 1)))
    ref_conv = jax.lax.conv_general_dilated(
        x_pad, w, window_strides=(2, 2), padding="VALID",
        dimension_numbers=("NCHW", "OIHW", "NCHW")) + b.reshape(1, C, 1, 1)
    err = float(jnp.max(jnp.abs(out_conv - ref_conv)))
    assert err < 2e-4, err

    # ---- with_conv = False: avg_pool2d(kernel_size=2, stride=2) ----
    out_pool = jax.block_until_ready(pool_fn(x))
    assert out_pool.shape == (N, C, H // 2, W // 2), out_pool.shape
    ref_pool = x.reshape(N, C, H // 2, 2, W // 2, 2).mean(axis=(3, 5))
    errp = float(jnp.max(jnp.abs(out_pool - ref_pool)))
    assert errp < 1e-5, errp

    print("KERNEL_OK")
</pallas_src>

<mosaic_0001>
module attributes {stable_mosaic.version = 11 : i64} {
  func.func @_conv3x3s2_kernel(%arg0: i32, %arg1: i32, %arg2: memref<1x8x9x24xf32, #tpu.memory_space<vmem>>, %arg3: memref<24x128xf32, #tpu.memory_space<vmem>>, %arg4: memref<12x128xf32, #tpu.memory_space<vmem>>, %arg5: memref<1x128xf32, #tpu.memory_space<vmem>>, %arg6: memref<1x64x128xf32, #tpu.memory_space<vmem>>) attributes {dimension_semantics = [#tpu.dimension_semantics<parallel>, #tpu.dimension_semantics<parallel>], iteration_bounds = array<i64: 2, 1>, scalar_prefetch = 0 : i64, scratch_operands = 0 : i64, tpu.core_type = #tpu.core_type<tc>, window_params = [{transform_indices = @transform_0, window_bounds = array<i64: 1, 8, 9, 24>}, {pipeline_mode = #tpu.pipeline_mode<synchronous>, transform_indices = @transform_1, window_bounds = array<i64: 24, 128>}, {pipeline_mode = #tpu.pipeline_mode<synchronous>, transform_indices = @transform_2, window_bounds = array<i64: 12, 128>}, {pipeline_mode = #tpu.pipeline_mode<synchronous>, transform_indices = @transform_3, window_bounds = array<i64: 1, 128>}, {transform_indices = @transform_4, window_bounds = array<i64: 1, 64, 128>}]} {
    %c0 = arith.constant 0 : index
    %c0_0 = arith.constant 0 : index
    %c0_1 = arith.constant 0 : index
    %c0_2 = arith.constant 0 : index
    %0 = vector.load %arg2[%c0, %c0_0, %c0_1, %c0_2] : memref<1x8x9x24xf32, #tpu.memory_space<vmem>>, vector<1x8x9x24xf32>
    %1 = vector.shape_cast %0 : vector<1x8x9x24xf32> to vector<8x9x24xf32>
    %2 = vector.shape_cast %1 : vector<8x9x24xf32> to vector<72x24xf32>
    %c0_3 = arith.constant 0 : index
    %c0_4 = arith.constant 0 : index
    %3 = vector.load %arg3[%c0_3, %c0_4] : memref<24x128xf32, #tpu.memory_space<vmem>>, vector<24x128xf32>
    %cst = arith.constant dense<0.000000e+00> : vector<72x128xf32>
    %4 = tpu.matmul %2, %3, %cst {dimension_numbers = #tpu.dot_dimension_numbers<[1], [0], [0], [1], [0, 0, 1, 1], [], []>} : vector<72x24xf32>, vector<24x128xf32>, vector<72x128xf32> -> vector<72x128xf32>
    %5 = vector.shape_cast %4 : vector<72x128xf32> to vector<8x9x128xf32>
    %6 = vector.extract_strided_slice %5 {offsets = [0, 0, 0], sizes = [8, 8, 128], strides = [1, 1, 1]} : vector<8x9x128xf32> to vector<8x8x128xf32>
    %7 = vector.shape_cast %6 : vector<8x8x128xf32> to vector<64x128xf32>
    %8 = vector.extract_strided_slice %1 {offsets = [0, 1, 0], sizes = [8, 8, 12], strides = [1, 1, 1]} : vector<8x9x24xf32> to vector<8x8x12xf32>
    %9 = vector.shape_cast %8 : vector<8x8x12xf32> to vector<64x12xf32>
    %c0_5 = arith.constant 0 : index
    %c0_6 = arith.constant 0 : index
    %10 = vector.load %arg4[%c0_5, %c0_6] : memref<12x128xf32, #tpu.memory_space<vmem>>, vector<12x128xf32>
    %cst_7 = arith.constant dense<0.000000e+00> : vector<64x128xf32>
    %11 = tpu.matmul %9, %10, %cst_7 {dimension_numbers = #tpu.dot_dimension_numbers<[1], [0], [0], [1], [0, 0, 1, 1], [], []>} : vector<64x12xf32>, vector<12x128xf32>, vector<64x128xf32> -> vector<64x128xf32>
    %12 = arith.addf %7, %11 : vector<64x128xf32>
    %c0_8 = arith.constant 0 : index
    %c0_9 = arith.constant 0 : index
    %13 = vector.load %arg5[%c0_8, %c0_9] : memref<1x128xf32, #tpu.memory_space<vmem>>, vector<1x128xf32>
    %14 = vector.broadcast %13 : vector<1x128xf32> to vector<64x128xf32>
    %15 = arith.addf %12, %14 : vector<64x128xf32>
    %c0_10 = arith.constant 0 : index
    %c0_11 = arith.constant 0 : index
    %c0_12 = arith.constant 0 : index
    %16 = vector.load %arg6[%c0_10, %c0_11, %c0_12] : memref<1x64x128xf32, #tpu.memory_space<vmem>>, vector<1x64x128xf32>
    %17 = vector.shape_cast %16 : vector<1x64x128xf32> to vector<64x128xf32>
    %18 = vector.shape_cast %15 : vector<64x128xf32> to vector<1x64x128xf32>
    tpu.vector_store %arg6[%c0_10, %c0_11, %c0_12], %18 {strides = array<i32>} : memref<1x64x128xf32, #tpu.memory_space<vmem>>, vector<1x64x128xf32>,
    return
  }
  func.func @transform_0(%arg0: i32, %arg1: i32) -> (i32, i32, i32, i32) {
    %c0_i32 = arith.constant 0 : i32
    %c0_i32_0 = arith.constant 0 : i32
    %c0_i32_1 = arith.constant 0 : i32
    return %arg0, %arg1, %c0_i32, %c0_i32_0 : i32, i32, i32, i32
  }
  func.func @transform_1(%arg0: i32, %arg1: i32) -> (i32, i32) {
    %c0_i32 = arith.constant 0 : i32
    %c0_i32_0 = arith.constant 0 : i32
    %c0_i32_1 = arith.constant 0 : i32
    return %c0_i32, %c0_i32_0 : i32, i32
  }
  func.func @transform_2(%arg0: i32, %arg1: i32) -> (i32, i32) {
    %c0_i32 = arith.constant 0 : i32
    %c0_i32_0 = arith.constant 0 : i32
    %c0_i32_1 = arith.constant 0 : i32
    return %c0_i32, %c0_i32_0 : i32, i32
  }
  func.func @transform_3(%arg0: i32, %arg1: i32) -> (i32, i32) {
    %c0_i32 = arith.constant 0 : i32
    %c0_i32_0 = arith.constant 0 : i32
    %c0_i32_1 = arith.constant 0 : i32
    return %c0_i32, %c0_i32_0 : i32, i32
  }
  func.func @transform_4(%arg0: i32, %arg1: i32) -> (i32, i32, i32) {
    %c0_i32 = arith.constant 0 : i32
    %c0_i32_0 = arith.constant 0 : i32
    return %arg0, %arg1, %c0_i32 : i32, i32, i32
  }
}

</mosaic_0001>

<llo_original>
// kernel: downsample_conv.1
$region0: #{downsample_conv.1}
  #allocation0 [shape = 'u32[]', space=smem, size = 0x4, offset = 0x4, fixed_abs, tag = 'smem constant byte address 0x4 - core index']
  #allocation1 [shape = 'u32[144,128]{1,0:T(1,128)}', space=vmem, size = 0x12000, scoped, tag = 'internal scratch']
  %s0 = inlined_call_operand.vmem [shape: f32[2,8,9,24], index: 0, kind: input, shape index: {}]
  %s1 = inlined_call_operand.vmem [shape: f32[24,128], index: 1, kind: input, shape index: {}]
  %s2 = inlined_call_operand.vmem [shape: f32[12,128], index: 2, kind: input, shape index: {}]
  %s3 = inlined_call_operand.vmem [shape: f32[1,128], index: 3, kind: input, shape index: {}]
  %s4 = inlined_call_operand.vmem [shape: f32[2,64,128], index: 4, kind: output, shape index: {}]
  %s5 = sld [smem:[#allocation0]]
  $region49: #{downsample_conv.1} parent=0
    _
  %s7 = ssub.s32 1, %s5
  %s8 = scalar_select 0, %s7, %s5
  loop: start=0, step=1, limit=4
  $region2: #{downsample_conv.1} parent=0 // loop_pre_header
    _
  $region3: #{downsample_conv.1} parent=0 // loop_header
    %s10 = sphi 0, %s14
    %p11 = scmp.ge.s32.totalorder %s10, 4
    %s17 = sphi 0, %s29
    %s18 = sphi 0, %s25
    %s19 = sphi 0, %s17
    %s20 = sphi 0, %s18
    %s21 = sphi 0, %s19
    %s22 = sphi 0, %s20
    %s34 = sphi 0, %s36
    %s37 = sphi 0, %s34
    %s38 = sphi 0, %s37
    %s54 = sphi 0, %s38
    %s58 = sphi 0, %s58
    %s60 = sphi 0, %s58
    %s61 = sphi 0, %s60
    %s75 = sphi 0, %s61
    %s79 = sphi 0, %s79
    %s81 = sphi 0, %s79
    %s82 = sphi 0, %s81
    %s96 = sphi 0, %s82
    %s100 = sphi 0, %s100
    %s102 = sphi 0, %s100
    %s103 = sphi 0, %s102
    %s117 = sphi 0, %s103
    %s125 = sphi 0, %s127
    %s128 = sphi 0, %s125
    %s129 = sphi 0, %s128
    %s145 = sphi 0, %s129
  $region4: #{downsample_conv.1} parent=0 // loop_header_branch
    %13 = sbr.rel (%p11) target = $region8
  $region5: #{downsample_conv.1} parent=0 // loop_body
    %s15 = ssub.s32 %s10, 1
    %s16 = ssub.s32 %s10, 2
    %s23 = sadd.s32 1, %s18
    %p24 = scmp.ge.s32.totalorder %s23, 1
    %s25 = scalar_select %p24, 0, %s23
    %s26 = sadd.s32 1, %s17
    %s27 = scalar_select %p24, %s26, %s17
    %p28 = scmp.ge.s32.totalorder %s27, 2
    %s29 = scalar_select %p28, 0, %s27
    %s30 = ssub.s32 %s17, %s29
    %s31 = ssub.s32 %s18, %s25
    %s32 = sor.u32 %s30, %s31
    %p33 = scmp.eq.s32.totalorder %s32, 0
    %s35 = sadd.s32 %s34, 1
    %s36 = scalar_select %p33, %s34, %s35
    %p39 = pneg %p33
    %p40 = scmp.eq.s32.totalorder %s10, 1
    %p41 = por %p39, %p40
    %p42 = scmp.ne.s32.totalorder %s34, %s37
    %p43 = scmp.eq.s32.totalorder %s10, 0
    %p44 = por %p42, %p43
    %p45 = scmp.ne.s32.totalorder %s34, %s37
    %p46 = scmp.eq.s32.totalorder %s15, 1
    %p47 = por %p45, %p46
    %p48 = scmp.ne.s32.totalorder %s37, %s38
    %p49 = scmp.eq.s32.totalorder %s15, 0
    %p50 = por %p48, %p49
    %p51 = scmp.ne.s32.totalorder %s37, %s38
    %p52 = scmp.eq.s32.totalorder %s16, 1
    %p53 = por %p51, %p52
    %p55 = scmp.ne.s32.totalorder %s38, %s54
    %p56 = scmp.eq.s32.totalorder %s16, 0
    %p57 = por %p55, %p56
    %s59 = sadd.s32 %s58, 1
    %p62 = scmp.eq.s32.totalorder %s10, 1
    %p63 = scmp.ne.s32.totalorder %s58, %s60
    %p64 = scmp.eq.s32.totalorder %s10, 0
    %p65 = por %p63, %p64
    %p66 = scmp.ne.s32.totalorder %s58, %s60
    %p67 = scmp.eq.s32.totalorder %s15, 1
    %p68 = por %p66, %p67
    %p69 = scmp.ne.s32.totalorder %s60, %s61
    %p70 = scmp.eq.s32.totalorder %s15, 0
    %p71 = por %p69, %p70
    %p72 = scmp.ne.s32.totalorder %s60, %s61
    %p73 = scmp.eq.s32.totalorder %s16, 1
    %p74 = por %p72, %p73
    %p76 = scmp.ne.s32.totalorder %s61, %s75
    %p77 = scmp.eq.s32.totalorder %s16, 0
    %p78 = por %p76, %p77
    %s80 = sadd.s32 %s79, 1
    %p83 = scmp.eq.s32.totalorder %s10, 1
    %p84 = scmp.ne.s32.totalorder %s79, %s81
    %p85 = scmp.eq.s32.totalorder %s10, 0
    %p86 = por %p84, %p85
    %p87 = scmp.ne.s32.totalorder %s79, %s81
    %p88 = scmp.eq.s32.totalorder %s15, 1
    %p89 = por %p87, %p88
    %p90 = scmp.ne.s32.totalorder %s81, %s82
    %p91 = scmp.eq.s32.totalorder %s15, 0
    %p92 = por %p90, %p91
    %p93 = scmp.ne.s32.totalorder %s81, %s82
    %p94 = scmp.eq.s32.totalorder %s16, 1
    %p95 = por %p93, %p94
    %p97 = scmp.ne.s32.totalorder %s82, %s96
    %p98 = scmp.eq.s32.totalorder %s16, 0
    %p99 = por %p97, %p98
    %s101 = sadd.s32 %s100, 1
    %p104 = scmp.eq.s32.totalorder %s10, 1
    %p105 = scmp.ne.s32.totalorder %s100, %s102
    %p106 = scmp.eq.s32.totalorder %s10, 0
    %p107 = por %p105, %p106
    %p108 = scmp.ne.s32.totalorder %s100, %s102
    %p109 = scmp.eq.s32.totalorder %s15, 1
    %p110 = por %p108, %p109
    %p111 = scmp.ne.s32.totalorder %s102, %s103
    %p112 = scmp.eq.s32.totalorder %s15, 0
    %p113 = por %p111, %p112
    %p114 = scmp.ne.s32.totalorder %s102, %s103
    %p115 = scmp.eq.s32.totalorder %s16, 1
    %p116 = por %p114, %p115
    %p118 = scmp.ne.s32.totalorder %s103, %s117
    %p119 = scmp.eq.s32.totalorder %s16, 0
    %p120 = por %p118, %p119
    %s121 = ssub.s32 %s17, %s29
    %s122 = ssub.s32 %s18, %s25
    %s123 = sor.u32 %s121, %s122
    %p124 = scmp.eq.s32.totalorder %s123, 0
    %s126 = sadd.s32 %s125, 1
    %s127 = scalar_select %p124, %s125, %s126
    %p130 = pneg %p124
    %p131 = scmp.eq.s32.totalorder %s10, 1
    %p132 = por %p130, %p131
    %p133 = scmp.ne.s32.totalorder %s125, %s128
    %p134 = scmp.eq.s32.totalorder %s10, 0
    %p135 = por %p133, %p134
    %p136 = scmp.ne.s32.totalorder %s125, %s128
    %p137 = scmp.eq.s32.totalorder %s15, 1
    %p138 = por %p136, %p137
    %p139 = scmp.ne.s32.totalorder %s128, %s129
    %p140 = scmp.eq.s32.totalorder %s15, 0
    %p141 = por %p139, %p140
    %p142 = scmp.ne.s32.totalorder %s128, %s129
    %p143 = scmp.eq.s32.totalorder %s16, 1
    %p144 = por %p142, %p143
    %p146 = scmp.ne.s32.totalorder %s129, %s145
    %p147 = scmp.eq.s32.totalorder %s16, 0
    %p148 = por %p146, %p147
    %p149 = scmp.le.s32.totalorder 1, %s10
    %p150 = scmp.lt.s32.totalorder %s10, 3
    %p151 = pnand %p149, %p150
    %p152 = pneg %p151
    // Predicated region
    $region9: #{downsample_conv.1} parent=5 // pred_check
      _
    $region10: #{downsample_conv.1} parent=5 // pred_check_branch
      %154 = sbr.rel (%p151) target = $region12
    $region11: #{downsample_conv.1} parent=5 // pred_region
      %s155 = ssub.s32 %s10, 1
      // Predicated region
      $region13: #{downsample_conv.1} parent=11 // pred_check
        %p156 = pneg %p71
      $region14: #{downsample_conv.1} parent=11 // pred_check_branch
        %158 = sbr.rel (%p156) target = $region16
      $region15: #{downsample_conv.1} parent=11 // pred_region
        _
      $region16: #{downsample_conv.1} parent=11 // pred_fallthru
        _
      // Predicated region
      $region17: #{downsample_conv.1} parent=11 // pred_check
        %p159 = pneg %p92
      $region18: #{downsample_conv.1} parent=11 // pred_check_branch
        %161 = sbr.rel (%p159) target = $region20
      $region19: #{downsample_conv.1} parent=11 // pred_region
        _
      $region20: #{downsample_conv.1} parent=11 // pred_fallthru
        _
      // Predicated region
      $region21: #{downsample_conv.1} parent=11 // pred_check
        %p162 = pneg %p113
      $region22: #{downsample_conv.1} parent=11 // pred_check_branch
        %164 = sbr.rel (%p162) target = $region24
      $region23: #{downsample_conv.1} parent=11 // pred_region
        _
      $region24: #{downsample_conv.1} parent=11 // pred_fallthru
        _
    $region12: #{downsample_conv.1} parent=5 // pred_fallthru
      _
    %p165 = scmp.lt.s32.totalorder %s10, 2
    // Predicated region
    $region25: #{downsample_conv.1} parent=5 // pred_check
      %p166 = pneg %p165
    $region26: #{downsample_conv.1} parent=5 // pred_check_branch
      %168 = sbr.rel (%p166) target = $region28
    $region27: #{downsample_conv.1} parent=5 // pred_region
      // Predicated region
      $region29: #{downsample_conv.1} parent=27 // pred_check
        %p169 = pneg %p44
      $region30: #{downsample_conv.1} parent=27 // pred_check_branch
        %171 = sbr.rel (%p169) target = $region32
      $region31: #{downsample_conv.1} parent=27 // pred_region
        %s172 = smul.u32 8, %s18
        %p173 = scmp.lt.s32.totalorder %s17, 1
        %s174 = scalar_select %p173, %s17, 1
        %p175 = scmp.lt.s32.totalorder %s172, 7
        %s176 = scalar_select %p175, %s172, 7
        %s177 = smul.addr %s176, 2
        %s178 = smul.addr %s174, 16
        %s179 = sadd.s32 %s177, %s178
        %s180 = smul.addr %s179, 8
        %s181 = scalar_lea.vmem %s0, %s180
        %s182 = smul.u32 8, %s18
      $region32: #{downsample_conv.1} parent=27 // pred_fallthru
        _
    $region28: #{downsample_conv.1} parent=5 // pred_fallthru
      _
    %p183 = scmp.le.s32.totalorder 1, %s10
    %p184 = scmp.lt.s32.totalorder %s10, 3
    %p185 = pnand %p183, %p184
    %p186 = pneg %p185
    // Predicated region
    $region33: #{downsample_conv.1} parent=5 // pred_check
      _
    $region34: #{downsample_conv.1} parent=5 // pred_check_branch
      %188 = sbr.rel (%p185) target = $region36
    $region35: #{downsample_conv.1} parent=5 // pred_region
      %s189 = ssub.s32 %s10, 1
      %s190 = smul.u32 8, %s20
      %p191 = scmp.lt.s32.totalorder %s19, 1
      %s192 = scalar_select %p191, %s19, 1
      %p193 = scmp.lt.s32.totalorder %s190, 7
      %s194 = scalar_select %p193, %s190, 7
      %s195 = smul.addr %s194, 2
      %s196 = smul.addr %s192, 16
      %s197 = sadd.s32 %s195, %s196
      %s198 = smul.addr %s197, 8
      %s199 = scalar_lea.vmem %s0, %s198
      %p200 = pneg %p50
      %p201 = pneg %p47
      %p202 = pneg %p71
      %p203 = pneg %p68
      %p204 = pneg %p92
      %p205 = pneg %p89
      %p206 = pneg %p113
      %p207 = pneg %p110
      %p208 = pneg %p141
      %p209 = pneg %p138
      %s210 = smul.u32 8, %s20
      %p211 = scmp.lt.s32.totalorder %s19, 1
      %s212 = scalar_select %p211, %s19, 1
      %p213 = scmp.lt.s32.totalorder %s210, 7
      %s214 = scalar_select %p213, %s210, 7
      %s215 = smul.addr %s212, 8
      %s216 = sadd.s32 %s214, %s215
      %s217 = smul.addr %s216, 8
      %s218 = scalar_lea.vmem %s4, %s217
      %s219 = smul.u32 8, %s20
      %p220 = scmp.lt.s32.totalorder %s19, 1
      %s221 = scalar_select %p220, %s19, 1
      %p222 = scmp.lt.s32.totalorder %s219, 7
      %s223 = scalar_select %p222, %s219, 7
      %s224 = smul.addr %s223, 2
      %s225 = smul.addr %s221, 16
      %s226 = sadd.s32 %s224, %s225
      %s227 = smul.addr %s226, 8
      %s228 = scalar_lea.vmem %s0, %s227
      %s229 = smul.u32 8, %s20
      %s230 = smul.u32 8, %s20
      %p231 = scmp.lt.s32.totalorder %s19, 1
      %s232 = scalar_select %p231, %s19, 1
      %p233 = scmp.lt.s32.totalorder %s230, 7
      %s234 = scalar_select %p233, %s230, 7
      %s235 = smul.addr %s232, 8
      %s236 = sadd.s32 %s234, %s235
      %s237 = smul.addr %s236, 8
      %s238 = scalar_lea.vmem %s4, %s237
      %s239 = smul.u32 8, %s20
      %v240 = vld [vmem:[%s228] sm:$0xff]
      %v241 = vld [vmem:[%s228 + $0x8] sm:$0x1]
      %v242 = vld [vmem:[%s228 + $0x10] sm:$0xff]
      %v243 = vld [vmem:[%s228 + $0x18] sm:$0x1]
      %v244 = vld [vmem:[%s228 + $0x20] sm:$0xff]
      %v245 = vld [vmem:[%s228 + $0x28] sm:$0x1]
      %v246 = vld [vmem:[%s228 + $0x30] sm:$0xff]
      %v247 = vld [vmem:[%s228 + $0x38] sm:$0x1]
      %v248 = vld [vmem:[%s228 + $0x40] sm:$0xff]
      %v249 = vld [vmem:[%s228 + $0x48] sm:$0x1]
      %v250 = vld [vmem:[%s228 + $0x50] sm:$0xff]
      %v251 = vld [vmem:[%s228 + $0x58] sm:$0x1]
      %v252 = vld [vmem:[%s228 + $0x60] sm:$0xff]
      %v253 = vld [vmem:[%s228 + $0x68] sm:$0x1]
      %v254 = vld [vmem:[%s228 + $0x70] sm:$0xff]
      %v255 = vld [vmem:[%s228 + $0x78] sm:$0x1]
      %v272 = vcombine.high %v240, %v240
      %v274 = vunpack.c.l.s4 1966171168
      %v275 = vunpack.c.0.s8 %v274
      %v276 = vlaneseq
      %v277 = vshrl.u32 %v276, 7
      %v278 = vsub.s32 %v275, %v277
      %v279 = vrot.slane %v240, %v278
      %v281 = vunpack.c.l.s4 1966171168
      %v282 = vunpack.c.0.s8 %v281
      %v283 = vlaneseq
      %v284 = vshrl.u32 %v283, 7
      %v285 = vsub.s32 %v282, %v284
      %v286 = vrot.slane %v272, %v285
      %v287 = vcombine.high %v279, %v279
      %v288 = vcombine.high %v286, %v286
      %v290 = vunpack.c.l.s4 1966171168
      %v291 = vunpack.c.0.s8 %v290
      %v292 = vlaneseq
      %v293 = vshrl.u32 %v292, 7
      %v294 = vsub.s32 %v291, %v293
      %v295 = vrot.slane %v279, %v294
      %v297 = vunpack.c.l.s4 1966171168
      %v298 = vunpack.c.0.s8 %v297
      %v299 = vlaneseq
      %v300 = vshrl.u32 %v299, 7
      %v301 = vsub.s32 %v298, %v300
      %v302 = vrot.slane %v286, %v301
      %v304 = vunpack.c.l.s4 1966171168
      %v305 = vunpack.c.0.s8 %v304
      %v306 = vlaneseq
      %v307 = vshrl.u32 %v306, 7
      %v308 = vsub.s32 %v305, %v307
      %v309 = vrot.slane %v287, %v308
      %v311 = vunpack.c.l.s4 1966171168
      %v312 = vunpack.c.0.s8 %v311
      %v313 = vlaneseq
      %v314 = vshrl.u32 %v313, 7
      %v315 = vsub.s32 %v312, %v314
      %v316 = vrot.slane %v288, %v315
      %v317 = vcombine.high %v295, %v295
      %v318 = vcombine.high %v302, %v302
      %v319 = vcombine.high %v309, %v309
      %v320 = vcombine.high %v316, %v316
      %v322 = vunpack.c.l.s4 1966171168
      %v323 = vunpack.c.0.s8 %v322
      %v324 = vlaneseq
      %v325 = vshrl.u32 %v324, 7
      %v326 = vsub.s32 %v323, %v325
      %v327 = vrot.slane %v241, %v326
      %v329 = vunpack.c.l.s4 1966171168
      %v330 = vunpack.c.0.s8 %v329
      %v331 = vlaneseq
      %v332 = vshrl.u32 %v331, 7
      %v333 = vsub.s32 %v330, %v332
      %v334 = vrot.slane %v327, %v333
      %v335 = vcombine.high %v242, %v242
      %v337 = vunpack.c.l.s4 1966171168
      %v338 = vunpack.c.0.s8 %v337
      %v339 = vlaneseq
      %v340 = vshrl.u32 %v339, 7
      %v341 = vsub.s32 %v338, %v340
      %v342 = vrot.slane %v242, %v341
      %v344 = vunpack.c.l.s4 1966171168
      %v345 = vunpack.c.0.s8 %v344
      %v346 = vlaneseq
      %v347 = vshrl.u32 %v346, 7
      %v348 = vsub.s32 %v345, %v347
      %v349 = vrot.slane %v335, %v348
      %v350 = vcombine.high %v342, %v342
      %v351 = vcombine.high %v349, %v349
      %v353 = vunpack.c.l.s4 1966171168
      %v354 = vunpack.c.0.s8 %v353
      %v355 = vlaneseq
      %v356 = vshrl.u32 %v355, 7
      %v357 = vsub.s32 %v354, %v356
      %v358 = vrot.slane %v342, %v357
      %v360 = vunpack.c.l.s4 1966171168
      %v361 = vunpack.c.0.s8 %v360
      %v362 = vlaneseq
      %v363 = vshrl.u32 %v362, 7
      %v364 = vsub.s32 %v361, %v363
      %v365 = vrot.slane %v349, %v364
      %v367 = vunpack.c.l.s4 1966171168
      %v368 = vunpack.c.0.s8 %v367
      %v369 = vlaneseq
      %v370 = vshrl.u32 %v369, 7
      %v371 = vsub.s32 %v368, %v370
      %v372 = vrot.slane %v350, %v371
      %v374 = vunpack.c.l.s4 1966171168
      %v375 = vunpack.c.0.s8 %v374
      %v376 = vlaneseq
      %v377 = vshrl.u32 %v376, 7
      %v378 = vsub.s32 %v375, %v377
      %v379 = vrot.slane %v351, %v378
      %v380 = vcombine.high %v358, %v358
      %v381 = vcombine.high %v365, %v365
      %v382 = vcombine.high %v372, %v372
      %v383 = vcombine.high %v379, %v379
      %v385 = vunpack.c.l.s4 1966171168
      %v386 = vunpack.c.0.s8 %v385
      %v387 = vlaneseq
      %v388 = vshrl.u32 %v387, 7
      %v389 = vsub.s32 %v386, %v388
      %v390 = vrot.slane %v243, %v389
      %v392 = vunpack.c.l.s4 1966171168
      %v393 = vunpack.c.0.s8 %v392
      %v394 = vlaneseq
      %v395 = vshrl.u32 %v394, 7
      %v396 = vsub.s32 %v393, %v395
      %v397 = vrot.slane %v390, %v396
      %v398 = vcombine.high %v244, %v244
      %v400 = vunpack.c.l.s4 1966171168
      %v401 = vunpack.c.0.s8 %v400
      %v402 = vlaneseq
      %v403 = vshrl.u32 %v402, 7
      %v404 = vsub.s32 %v401, %v403
      %v405 = vrot.slane %v244, %v404
      %v407 = vunpack.c.l.s4 1966171168
      %v408 = vunpack.c.0.s8 %v407
      %v409 = vlaneseq
      %v410 = vshrl.u32 %v409, 7
      %v411 = vsub.s32 %v408, %v410
      %v412 = vrot.slane %v398, %v411
      %v413 = vcombine.high %v405, %v405
      %v414 = vcombine.high %v412, %v412
      %v416 = vunpack.c.l.s4 1966171168
      %v417 = vunpack.c.0.s8 %v416
      %v418 = vlaneseq
      %v419 = vshrl.u32 %v418, 7
      %v420 = vsub.s32 %v417, %v419
      %v421 = vrot.slane %v405, %v420
      %v423 = vunpack.c.l.s4 1966171168
      %v424 = vunpack.c.0.s8 %v423
      %v425 = vlaneseq
      %v426 = vshrl.u32 %v425, 7
      %v427 = vsub.s32 %v424, %v426
      %v428 = vrot.slane %v412, %v427
      %v430 = vunpack.c.l.s4 1966171168
      %v431 = vunpack.c.0.s8 %v430
      %v432 = vlaneseq
      %v433 = vshrl.u32 %v432, 7
      %v434 = vsub.s32 %v431, %v433
      %v435 = vrot.slane %v413, %v434
      %v437 = vunpack.c.l.s4 1966171168
      %v438 = vunpack.c.0.s8 %v437
      %v439 = vlaneseq
      %v440 = vshrl.u32 %v439, 7
      %v441 = vsub.s32 %v438, %v440
      %v442 = vrot.slane %v414, %v441
      %v443 = vcombine.high %v421, %v421
      %v444 = vcombine.high %v428, %v428
      %v445 = vcombine.high %v435, %v435
      %v446 = vcombine.high %v442, %v442
      %v448 = vunpack.c.l.s4 1966171168
      %v449 = vunpack.c.0.s8 %v448
      %v450 = vlaneseq
      %v451 = vshrl.u32 %v450, 7
      %v452 = vsub.s32 %v449, %v451
      %v453 = vrot.slane %v245, %v452
      %v455 = vunpack.c.l.s4 1966171168
      %v456 = vunpack.c.0.s8 %v455
      %v457 = vlaneseq
      %v458 = vshrl.u32 %v457, 7
      %v459 = vsub.s32 %v456, %v458
      %v460 = vrot.slane %v453, %v459
      %v461 = vcombine.high %v246, %v246
      %v463 = vunpack.c.l.s4 1966171168
      %v464 = vunpack.c.0.s8 %v463
      %v465 = vlaneseq
      %v466 = vshrl.u32 %v465, 7
      %v467 = vsub.s32 %v464, %v466
      %v468 = vrot.slane %v246, %v467
      %v470 = vunpack.c.l.s4 1966171168
      %v471 = vunpack.c.0.s8 %v470
      %v472 = vlaneseq
      %v473 = vshrl.u32 %v472, 7
      %v474 = vsub.s32 %v471, %v473
      %v475 = vrot.slane %v461, %v474
      %v476 = vcombine.high %v468, %v468
      %v477 = vcombine.high %v475, %v475
      %v479 = vunpack.c.l.s4 1966171168
      %v480 = vunpack.c.0.s8 %v479
      %v481 = vlaneseq
      %v482 = vshrl.u32 %v481, 7
      %v483 = vsub.s32 %v480, %v482
      %v484 = vrot.slane %v468, %v483
      %v486 = vunpack.c.l.s4 1966171168
      %v487 = vunpack.c.0.s8 %v486
      %v488 = vlaneseq
      %v489 = vshrl.u32 %v488, 7
      %v490 = vsub.s32 %v487, %v489
      %v491 = vrot.slane %v475, %v490
      %v493 = vunpack.c.l.s4 1966171168
      %v494 = vunpack.c.0.s8 %v493
      %v495 = vlaneseq
      %v496 = vshrl.u32 %v495, 7
      %v497 = vsub.s32 %v494, %v496
      %v498 = vrot.slane %v476, %v497
      %v500 = vunpack.c.l.s4 1966171168
      %v501 = vunpack.c.0.s8 %v500
      %v502 = vlaneseq
      %v503 = vshrl.u32 %v502, 7
      %v504 = vsub.s32 %v501, %v503
      %v505 = vrot.slane %v477, %v504
      %v506 = vcombine.high %v484, %v484
      %v507 = vcombine.high %v491, %v491
      %v508 = vcombine.high %v498, %v498
      %v509 = vcombine.high %v505, %v505
      %v511 = vunpack.c.l.s4 1966171168
      %v512 = vunpack.c.0.s8 %v511
      %v513 = vlaneseq
      %v514 = vshrl.u32 %v513, 7
      %v515 = vsub.s32 %v512, %v514
      %v516 = vrot.slane %v247, %v515
      %v518 = vunpack.c.l.s4 1966171168
      %v519 = vunpack.c.0.s8 %v518
      %v520 = vlaneseq
      %v521 = vshrl.u32 %v520, 7
      %v522 = vsub.s32 %v519, %v521
      %v523 = vrot.slane %v516, %v522
      %v524 = vcombine.high %v248, %v248
      %v526 = vunpack.c.l.s4 1966171168
      %v527 = vunpack.c.0.s8 %v526
      %v528 = vlaneseq
      %v529 = vshrl.u32 %v528, 7
      %v530 = vsub.s32 %v527, %v529
      %v531 = vrot.slane %v248, %v530
      %v533 = vunpack.c.l.s4 1966171168
      %v534 = vunpack.c.0.s8 %v533
      %v535 = vlaneseq
      %v536 = vshrl.u32 %v535, 7
      %v537 = vsub.s32 %v534, %v536
      %v538 = vrot.slane %v524, %v537
      %v539 = vcombine.high %v531, %v531
      %v540 = vcombine.high %v538, %v538
      %v542 = vunpack.c.l.s4 1966171168
      %v543 = vunpack.c.0.s8 %v542
      %v544 = vlaneseq
      %v545 = vshrl.u32 %v544, 7
      %v546 = vsub.s32 %v543, %v545
      %v547 = vrot.slane %v531, %v546
      %v549 = vunpack.c.l.s4 1966171168
      %v550 = vunpack.c.0.s8 %v549
      %v551 = vlaneseq
      %v552 = vshrl.u32 %v551, 7
      %v553 = vsub.s32 %v550, %v552
      %v554 = vrot.slane %v538, %v553
      %v556 = vunpack.c.l.s4 1966171168
      %v557 = vunpack.c.0.s8 %v556
      %v558 = vlaneseq
      %v559 = vshrl.u32 %v558, 7
      %v560 = vsub.s32 %v557, %v559
      %v561 = vrot.slane %v539, %v560
      %v563 = vunpack.c.l.s4 1966171168
      %v564 = vunpack.c.0.s8 %v563
      %v565 = vlaneseq
      %v566 = vshrl.u32 %v565, 7
      %v567 = vsub.s32 %v564, %v566
      %v568 = vrot.slane %v540, %v567
      %v569 = vcombine.high %v547, %v547
      %v570 = vcombine.high %v554, %v554
      %v571 = vcombine.high %v561, %v561
      %v572 = vcombine.high %v568, %v568
      %v574 = vunpack.c.l.s4 1966171168
      %v575 = vunpack.c.0.s8 %v574
      %v576 = vlaneseq
      %v577 = vshrl.u32 %v576, 7
      %v578 = vsub.s32 %v575, %v577
      %v579 = vrot.slane %v249, %v578
      %v581 = vunpack.c.l.s4 1966171168
      %v582 = vunpack.c.0.s8 %v581
      %v583 = vlaneseq
      %v584 = vshrl.u32 %v583, 7
      %v585 = vsub.s32 %v582, %v584
      %v586 = vrot.slane %v579, %v585
      %v587 = vcombine.high %v250, %v250
      %v589 = vunpack.c.l.s4 1966171168
      %v590 = vunpack.c.0.s8 %v589
      %v591 = vlaneseq
      %v592 = vshrl.u32 %v591, 7
      %v593 = vsub.s32 %v590, %v592
      %v594 = vrot.slane %v250, %v593
      %v596 = vunpack.c.l.s4 1966171168
      %v597 = vunpack.c.0.s8 %v596
      %v598 = vlaneseq
      %v599 = vshrl.u32 %v598, 7
      %v600 = vsub.s32 %v597, %v599
      %v601 = vrot.slane %v587, %v600
      %v602 = vcombine.high %v594, %v594
      %v603 = vcombine.high %v601, %v601
      %v605 = vunpack.c.l.s4 1966171168
      %v606 = vunpack.c.0.s8 %v605
      %v607 = vlaneseq
      %v608 = vshrl.u32 %v607, 7
      %v609 = vsub.s32 %v606, %v608
      %v610 = vrot.slane %v594, %v609
      %v612 = vunpack.c.l.s4 1966171168
      %v613 = vunpack.c.0.s8 %v612
      %v614 = vlaneseq
      %v615 = vshrl.u32 %v614, 7
      %v616 = vsub.s32 %v613, %v615
      %v617 = vrot.slane %v601, %v616
      %v619 = vunpack.c.l.s4 1966171168
      %v620 = vunpack.c.0.s8 %v619
      %v621 = vlaneseq
      %v622 = vshrl.u32 %v621, 7
      %v623 = vsub.s32 %v620, %v622
      %v624 = vrot.slane %v602, %v623
      %v626 = vunpack.c.l.s4 1966171168
      %v627 = vunpack.c.0.s8 %v626
      %v628 = vlaneseq
      %v629 = vshrl.u32 %v628, 7
      %v630 = vsub.s32 %v627, %v629
      %v631 = vrot.slane %v603, %v630
      %v632 = vcombine.high %v610, %v610
      %v633 = vcombine.high %v617, %v617
      %v634 = vcombine.high %v624, %v624
      %v635 = vcombine.high %v631, %v631
      %v637 = vunpack.c.l.s4 1966171168
      %v638 = vunpack.c.0.s8 %v637
      %v639 = vlaneseq
      %v640 = vshrl.u32 %v639, 7
      %v641 = vsub.s32 %v638, %v640
      %v642 = vrot.slane %v251, %v641
      %v644 = vunpack.c.l.s4 1966171168
      %v645 = vunpack.c.0.s8 %v644
      %v646 = vlaneseq
      %v647 = vshrl.u32 %v646, 7
      %v648 = vsub.s32 %v645, %v647
      %v649 = vrot.slane %v642, %v648
      %v650 = vcombine.high %v252, %v252
      %v652 = vunpack.c.l.s4 1966171168
      %v653 = vunpack.c.0.s8 %v652
      %v654 = vlaneseq
      %v655 = vshrl.u32 %v654, 7
      %v656 = vsub.s32 %v653, %v655
      %v657 = vrot.slane %v252, %v656
      %v659 = vunpack.c.l.s4 1966171168
      %v660 = vunpack.c.0.s8 %v659
      %v661 = vlaneseq
      %v662 = vshrl.u32 %v661, 7
      %v663 = vsub.s32 %v660, %v662
      %v664 = vrot.slane %v650, %v663
      %v665 = vcombine.high %v657, %v657
      %v666 = vcombine.high %v664, %v664
      %v668 = vunpack.c.l.s4 1966171168
      %v669 = vunpack.c.0.s8 %v668
      %v670 = vlaneseq
      %v671 = vshrl.u32 %v670, 7
      %v672 = vsub.s32 %v669, %v671
      %v673 = vrot.slane %v657, %v672
      %v675 = vunpack.c.l.s4 1966171168
      %v676 = vunpack.c.0.s8 %v675
      %v677 = vlaneseq
      %v678 = vshrl.u32 %v677, 7
      %v679 = vsub.s32 %v676, %v678
      %v680 = vrot.slane %v664, %v679
      %v682 = vunpack.c.l.s4 1966171168
      %v683 = vunpack.c.0.s8 %v682
      %v684 = vlaneseq
      %v685 = vshrl.u32 %v684, 7
      %v686 = vsub.s32 %v683, %v685
      %v687 = vrot.slane %v665, %v686
      %v689 = vunpack.c.l.s4 1966171168
      %v690 = vunpack.c.0.s8 %v689
      %v691 = vlaneseq
      %v692 = vshrl.u32 %v691, 7
      %v693 = vsub.s32 %v690, %v692
      %v694 = vrot.slane %v666, %v693
      %v695 = vcombine.high %v673, %v673
      %v696 = vcombine.high %v680, %v680
      %v697 = vcombine.high %v687, %v687
      %v698 = vcombine.high %v694, %v694
      %v700 = vunpack.c.l.s4 1966171168
      %v701 = vunpack.c.0.s8 %v700
      %v702 = vlaneseq
      %v703 = vshrl.u32 %v702, 7
      %v704 = vsub.s32 %v701, %v703
      %v705 = vrot.slane %v253, %v704
      %v707 = vunpack.c.l.s4 1966171168
      %v708 = vunpack.c.0.s8 %v707
      %v709 = vlaneseq
      %v710 = vshrl.u32 %v709, 7
      %v711 = vsub.s32 %v708, %v710
      %v712 = vrot.slane %v705, %v711
      %v713 = vcombine.high %v254, %v254
      %v715 = vunpack.c.l.s4 1966171168
      %v716 = vunpack.c.0.s8 %v715
      %v717 = vlaneseq
      %v718 = vshrl.u32 %v717, 7
      %v719 = vsub.s32 %v716, %v718
      %v720 = vrot.slane %v254, %v719
      %v722 = vunpack.c.l.s4 1966171168
      %v723 = vunpack.c.0.s8 %v722
      %v724 = vlaneseq
      %v725 = vshrl.u32 %v724, 7
      %v726 = vsub.s32 %v723, %v725
      %v727 = vrot.slane %v713, %v726
      %v728 = vcombine.high %v720, %v720
      %v729 = vcombine.high %v727, %v727
      %v731 = vunpack.c.l.s4 1966171168
      %v732 = vunpack.c.0.s8 %v731
      %v733 = vlaneseq
      %v734 = vshrl.u32 %v733, 7
      %v735 = vsub.s32 %v732, %v734
      %v736 = vrot.slane %v720, %v735
      %v738 = vunpack.c.l.s4 1966171168
      %v739 = vunpack.c.0.s8 %v738
      %v740 = vlaneseq
      %v741 = vshrl.u32 %v740, 7
      %v742 = vsub.s32 %v739, %v741
      %v743 = vrot.slane %v727, %v742
      %v745 = vunpack.c.l.s4 1966171168
      %v746 = vunpack.c.0.s8 %v745
      %v747 = vlaneseq
      %v748 = vshrl.u32 %v747, 7
      %v749 = vsub.s32 %v746, %v748
      %v750 = vrot.slane %v728, %v749
      %v752 = vunpack.c.l.s4 1966171168
      %v753 = vunpack.c.0.s8 %v752
      %v754 = vlaneseq
      %v755 = vshrl.u32 %v754, 7
      %v756 = vsub.s32 %v753, %v755
      %v757 = vrot.slane %v729, %v756
      %v758 = vcombine.high %v736, %v736
      %v759 = vcombine.high %v743, %v743
      %v760 = vcombine.high %v750, %v750
      %v761 = vcombine.high %v757, %v757
      %v763 = vunpack.c.l.s4 1966171168
      %v764 = vunpack.c.0.s8 %v763
      %v765 = vlaneseq
      %v766 = vshrl.u32 %v765, 7
      %v767 = vsub.s32 %v764, %v766
      %v768 = vrot.slane %v255, %v767
      %v770 = vunpack.c.l.s4 1966171168
      %v771 = vunpack.c.0.s8 %v770
      %v772 = vlaneseq
      %v773 = vshrl.u32 %v772, 7
      %v774 = vsub.s32 %v771, %v773
      %v775 = vrot.slane %v768, %v774
      %v776 = vld [vmem:[%s1] sm:$0xff]
      %v777 = vld [vmem:[%s1 + $0x8] sm:$0xff]
      %v778 = vld [vmem:[%s1 + $0x10] sm:$0xff]
      %v779 = vcombine.low %v295, %v309
      %v780 = vcombine.low %v317, %v319
      %v781 = vcombine.low %v302, %v316
      %v782 = vcombine.low %v318, %v320
      %v784 = vunpack.c.l.s4 1966171168
      %v785 = vunpack.c.0.s8 %v784
      %v786 = vlaneseq
      %v787 = vshrl.u32 %v786, 7
      %v788 = vsub.s32 %v785, %v787
      %v789 = vrot.slane %v779, %v788
      %v791 = vunpack.c.l.s4 1966171168
      %v792 = vunpack.c.0.s8 %v791
      %v793 = vlaneseq
      %v794 = vshrl.u32 %v793, 7
      %v795 = vsub.s32 %v792, %v794
      %v796 = vrot.slane %v780, %v795
      %v798 = vunpack.c.l.s4 1966171168
      %v799 = vunpack.c.0.s8 %v798
      %v800 = vlaneseq
      %v801 = vshrl.u32 %v800, 7
      %v802 = vsub.s32 %v799, %v801
      %v803 = vrot.slane %v781, %v802
      %v805 = vunpack.c.l.s4 1966171168
      %v806 = vunpack.c.0.s8 %v805
      %v807 = vlaneseq
      %v808 = vshrl.u32 %v807, 7
      %v809 = vsub.s32 %v806, %v808
      %v810 = vrot.slane %v782, %v809
      %v811 = vcombine.low %v789, %v796
      %v812 = vcombine.low %v803, %v810
      %v814 = vunpack.c.l.s4 1966171168
      %v815 = vunpack.c.0.s8 %v814
      %v816 = vlaneseq
      %v817 = vshrl.u32 %v816, 7
      %v818 = vsub.s32 %v815, %v817
      %v819 = vrot.slane %v811, %v818
      %v821 = vunpack.c.l.s4 1966171168
      %v822 = vunpack.c.0.s8 %v821
      %v823 = vlaneseq
      %v824 = vshrl.u32 %v823, 7
      %v825 = vsub.s32 %v822, %v824
      %v826 = vrot.slane %v812, %v825
      %v827 = vcombine.low %v819, %v826
      %v828 = vcombine.low %v334, %v358
      %v829 = vcombine.low %v372, %v380
      %v830 = vcombine.low %v382, %v365
      %v831 = vcombine.low %v379, %v381
      %v833 = vunpack.c.l.s4 1966171168
      %v834 = vunpack.c.0.s8 %v833
      %v835 = vlaneseq
      %v836 = vshrl.u32 %v835, 7
      %v837 = vsub.s32 %v834, %v836
      %v838 = vrot.slane %v828, %v837
      %v840 = vunpack.c.l.s4 1966171168
      %v841 = vunpack.c.0.s8 %v840
      %v842 = vlaneseq
      %v843 = vshrl.u32 %v842, 7
      %v844 = vsub.s32 %v841, %v843
      %v845 = vrot.slane %v829, %v844
      %v847 = vunpack.c.l.s4 1966171168
      %v848 = vunpack.c.0.s8 %v847
      %v849 = vlaneseq
      %v850 = vshrl.u32 %v849, 7
      %v851 = vsub.s32 %v848, %v850
      %v852 = vrot.slane %v830, %v851
      %v854 = vunpack.c.l.s4 1966171168
      %v855 = vunpack.c.0.s8 %v854
      %v856 = vlaneseq
      %v857 = vshrl.u32 %v856, 7
      %v858 = vsub.s32 %v855, %v857
      %v859 = vrot.slane %v831, %v858
      %v860 = vcombine.low %v838, %v845
      %v861 = vcombine.low %v852, %v859
      %v863 = vunpack.c.l.s4 1966171168
      %v864 = vunpack.c.0.s8 %v863
      %v865 = vlaneseq
      %v866 = vshrl.u32 %v865, 7
      %v867 = vsub.s32 %v864, %v866
      %v868 = vrot.slane %v860, %v867
      %v870 = vunpack.c.l.s4 1966171168
      %v871 = vunpack.c.0.s8 %v870
      %v872 = vlaneseq
      %v873 = vshrl.u32 %v872, 7
      %v874 = vsub.s32 %v871, %v873
      %v875 = vrot.slane %v861, %v874
      %v876 = vcombine.low %v868, %v875
      %v877 = vcombine.low %v383, %v397
      %v878 = vcombine.low %v421, %v435
      %v879 = vcombine.low %v443, %v445
      %v880 = vcombine.low %v428, %v442
      %v882 = vunpack.c.l.s4 1966171168
      %v883 = vunpack.c.0.s8 %v882
      %v884 = vlaneseq
      %v885 = vshrl.u32 %v884, 7
      %v886 = vsub.s32 %v883, %v885
      %v887 = vrot.slane %v877, %v886
      %v889 = vunpack.c.l.s4 1966171168
      %v890 = vunpack.c.0.s8 %v889
      %v891 = vlaneseq
      %v892 = vshrl.u32 %v891, 7
      %v893 = vsub.s32 %v890, %v892
      %v894 = vrot.slane %v878, %v893
      %v896 = vunpack.c.l.s4 1966171168
      %v897 = vunpack.c.0.s8 %v896
      %v898 = vlaneseq
      %v899 = vshrl.u32 %v898, 7
      %v900 = vsub.s32 %v897, %v899
      %v901 = vrot.slane %v879, %v900
      %v903 = vunpack.c.l.s4 1966171168
      %v904 = vunpack.c.0.s8 %v903
      %v905 = vlaneseq
      %v906 = vshrl.u32 %v905, 7
      %v907 = vsub.s32 %v904, %v906
      %v908 = vrot.slane %v880, %v907
      %v909 = vcombine.low %v887, %v894
      %v910 = vcombine.low %v901, %v908
      %v912 = vunpack.c.l.s4 1966171168
      %v913 = vunpack.c.0.s8 %v912
      %v914 = vlaneseq
      %v915 = vshrl.u32 %v914, 7
      %v916 = vsub.s32 %v913, %v915
      %v917 = vrot.slane %v909, %v916
      %v919 = vunpack.c.l.s4 1966171168
      %v920 = vunpack.c.0.s8 %v919
      %v921 = vlaneseq
      %v922 = vshrl.u32 %v921, 7
      %v923 = vsub.s32 %v920, %v922
      %v924 = vrot.slane %v910, %v923
      %v925 = vcombine.low %v917, %v924
      %v926 = vcombine.low %v444, %v446
      %v927 = vcombine.low %v460, %v484
      %v928 = vcombine.low %v498, %v506
      %v929 = vcombine.low %v508, %v491
      %v931 = vunpack.c.l.s4 1966171168
      %v932 = vunpack.c.0.s8 %v931
      %v933 = vlaneseq
      %v934 = vshrl.u32 %v933, 7
      %v935 = vsub.s32 %v932, %v934
      %v936 = vrot.slane %v926, %v935
      %v938 = vunpack.c.l.s4 1966171168
      %v939 = vunpack.c.0.s8 %v938
      %v940 = vlaneseq
      %v941 = vshrl.u32 %v940, 7
      %v942 = vsub.s32 %v939, %v941
      %v943 = vrot.slane %v927, %v942
      %v945 = vunpack.c.l.s4 1966171168
      %v946 = vunpack.c.0.s8 %v945
      %v947 = vlaneseq
      %v948 = vshrl.u32 %v947, 7
      %v949 = vsub.s32 %v946, %v948
      %v950 = vrot.slane %v928, %v949
      %v952 = vunpack.c.l.s4 1966171168
      %v953 = vunpack.c.0.s8 %v952
      %v954 = vlaneseq
      %v955 = vshrl.u32 %v954, 7
      %v956 = vsub.s32 %v953, %v955
      %v957 = vrot.slane %v929, %v956
      %v958 = vcombine.low %v936, %v943
      %v959 = vcombine.low %v950, %v957
      %v961 = vunpack.c.l.s4 1966171168
      %v962 = vunpack.c.0.s8 %v961
      %v963 = vlaneseq
      %v964 = vshrl.u32 %v963, 7
      %v965 = vsub.s32 %v962, %v964
      %v966 = vrot.slane %v958, %v965
      %v968 = vunpack.c.l.s4 1966171168
      %v969 = vunpack.c.0.s8 %v968
      %v970 = vlaneseq
      %v971 = vshrl.u32 %v970, 7
      %v972 = vsub.s32 %v969, %v971
      %v973 = vrot.slane %v959, %v972
      %v974 = vcombine.low %v966, %v973
      %v975 = vcombine.low %v505, %v507
      %v976 = vcombine.low %v509, %v523
      %v977 = vcombine.low %v547, %v561
      %v978 = vcombine.low %v569, %v571
      %v980 = vunpack.c.l.s4 1966171168
      %v981 = vunpack.c.0.s8 %v980
      %v982 = vlaneseq
      %v983 = vshrl.u32 %v982, 7
      %v984 = vsub.s32 %v981, %v983
      %v985 = vrot.slane %v975, %v984
      %v987 = vunpack.c.l.s4 1966171168
      %v988 = vunpack.c.0.s8 %v987
      %v989 = vlaneseq
      %v990 = vshrl.u32 %v989, 7
      %v991 = vsub.s32 %v988, %v990
      %v992 = vrot.slane %v976, %v991
      %v994 = vunpack.c.l.s4 1966171168
      %v995 = vunpack.c.0.s8 %v994
      %v996 = vlaneseq
      %v997 = vshrl.u32 %v996, 7
      %v998 = vsub.s32 %v995, %v997
      %v999 = vrot.slane %v977, %v998
      %v1001 = vunpack.c.l.s4 1966171168
      %v1002 = vunpack.c.0.s8 %v1001
      %v1003 = vlaneseq
      %v1004 = vshrl.u32 %v1003, 7
      %v1005 = vsub.s32 %v1002, %v1004
      %v1006 = vrot.slane %v978, %v1005
      %v1007 = vcombine.low %v985, %v992
      %v1008 = vcombine.low %v999, %v1006
      %v1010 = vunpack.c.l.s4 1966171168
      %v1011 = vunpack.c.0.s8 %v1010
      %v1012 = vlaneseq
      %v1013 = vshrl.u32 %v1012, 7
      %v1014 = vsub.s32 %v1011, %v1013
      %v1015 = vrot.slane %v1007, %v1014
      %v1017 = vunpack.c.l.s4 1966171168
      %v1018 = vunpack.c.0.s8 %v1017
      %v1019 = vlaneseq
      %v1020 = vshrl.u32 %v1019, 7
      %v1021 = vsub.s32 %v1018, %v1020
      %v1022 = vrot.slane %v1008, %v1021
      %v1023 = vcombine.low %v1015, %v1022
      %v1024 = vcombine.low %v554, %v568
      %v1025 = vcombine.low %v570, %v572
      %v1026 = vcombine.low %v586, %v610
      %v1027 = vcombine.low %v624, %v632
      %v1029 = vunpack.c.l.s4 1966171168
      %v1030 = vunpack.c.0.s8 %v1029
      %v1031 = vlaneseq
      %v1032 = vshrl.u32 %v1031, 7
      %v1033 = vsub.s32 %v1030, %v1032
      %v1034 = vrot.slane %v1024, %v1033
      %v1036 = vunpack.c.l.s4 1966171168
      %v1037 = vunpack.c.0.s8 %v1036
      %v1038 = vlaneseq
      %v1039 = vshrl.u32 %v1038, 7
      %v1040 = vsub.s32 %v1037, %v1039
      %v1041 = vrot.slane %v1025, %v1040
      %v1043 = vunpack.c.l.s4 1966171168
      %v1044 = vunpack.c.0.s8 %v1043
      %v1045 = vlaneseq
      %v1046 = vshrl.u32 %v1045, 7
      %v1047 = vsub.s32 %v1044, %v1046
      %v1048 = vrot.slane %v1026, %v1047
      %v1050 = vunpack.c.l.s4 1966171168
      %v1051 = vunpack.c.0.s8 %v1050
      %v1052 = vlaneseq
      %v1053 = vshrl.u32 %v1052, 7
      %v1054 = vsub.s32 %v1051, %v1053
      %v1055 = vrot.slane %v1027, %v1054
      %v1056 = vcombine.low %v1034, %v1041
      %v1057 = vcombine.low %v1048, %v1055
      %v1059 = vunpack.c.l.s4 1966171168
      %v1060 = vunpack.c.0.s8 %v1059
      %v1061 = vlaneseq
      %v1062 = vshrl.u32 %v1061, 7
      %v1063 = vsub.s32 %v1060, %v1062
      %v1064 = vrot.slane %v1056, %v1063
      %v1066 = vunpack.c.l.s4 1966171168
      %v1067 = vunpack.c.0.s8 %v1066
      %v1068 = vlaneseq
      %v1069 = vshrl.u32 %v1068, 7
      %v1070 = vsub.s32 %v1067, %v1069
      %v1071 = vrot.slane %v1057, %v1070
      %v1072 = vcombine.low %v1064, %v1071
      %v1073 = vcombine.low %v634, %v617
      %v1074 = vcombine.low %v631, %v633
      %v1075 = vcombine.low %v635, %v649
      %v1076 = vcombine.low %v673, %v687
      %v1078 = vunpack.c.l.s4 1966171168
      %v1079 = vunpack.c.0.s8 %v1078
      %v1080 = vlaneseq
      %v1081 = vshrl.u32 %v1080, 7
      %v1082 = vsub.s32 %v1079, %v1081
      %v1083 = vrot.slane %v1073, %v1082
      %v1085 = vunpack.c.l.s4 1966171168
      %v1086 = vunpack.c.0.s8 %v1085
      %v1087 = vlaneseq
      %v1088 = vshrl.u32 %v1087, 7
      %v1089 = vsub.s32 %v1086, %v1088
      %v1090 = vrot.slane %v1074, %v1089
      %v1092 = vunpack.c.l.s4 1966171168
      %v1093 = vunpack.c.0.s8 %v1092
      %v1094 = vlaneseq
      %v1095 = vshrl.u32 %v1094, 7
      %v1096 = vsub.s32 %v1093, %v1095
      %v1097 = vrot.slane %v1075, %v1096
      %v1099 = vunpack.c.l.s4 1966171168
      %v1100 = vunpack.c.0.s8 %v1099
      %v1101 = vlaneseq
      %v1102 = vshrl.u32 %v1101, 7
      %v1103 = vsub.s32 %v1100, %v1102
      %v1104 = vrot.slane %v1076, %v1103
      %v1105 = vcombine.low %v1083, %v1090
      %v1106 = vcombine.low %v1097, %v1104
      %v1108 = vunpack.c.l.s4 1966171168
      %v1109 = vunpack.c.0.s8 %v1108
      %v1110 = vlaneseq
      %v1111 = vshrl.u32 %v1110, 7
      %v1112 = vsub.s32 %v1109, %v1111
      %v1113 = vrot.slane %v1105, %v1112
      %v1115 = vunpack.c.l.s4 1966171168
      %v1116 = vunpack.c.0.s8 %v1115
      %v1117 = vlaneseq
      %v1118 = vshrl.u32 %v1117, 7
      %v1119 = vsub.s32 %v1116, %v1118
      %v1120 = vrot.slane %v1106, %v1119
      %v1121 = vcombine.low %v1113, %v1120
      %v1122 = vcombine.low %v695, %v697
      %v1123 = vcombine.low %v680, %v694
      %v1124 = vcombine.low %v696, %v698
      %v1125 = vcombine.low %v712, %v736
      %v1127 = vunpack.c.l.s4 1966171168
      %v1128 = vunpack.c.0.s8 %v1127
      %v1129 = vlaneseq
      %v1130 = vshrl.u32 %v1129, 7
      %v1131 = vsub.s32 %v1128, %v1130
      %v1132 = vrot.slane %v1122, %v1131
      %v1134 = vunpack.c.l.s4 1966171168
      %v1135 = vunpack.c.0.s8 %v1134
      %v1136 = vlaneseq
      %v1137 = vshrl.u32 %v1136, 7
      %v1138 = vsub.s32 %v1135, %v1137
      %v1139 = vrot.slane %v1123, %v1138
      %v1141 = vunpack.c.l.s4 1966171168
      %v1142 = vunpack.c.0.s8 %v1141
      %v1143 = vlaneseq
      %v1144 = vshrl.u32 %v1143, 7
      %v1145 = vsub.s32 %v1142, %v1144
      %v1146 = vrot.slane %v1124, %v1145
      %v1148 = vunpack.c.l.s4 1966171168
      %v1149 = vunpack.c.0.s8 %v1148
      %v1150 = vlaneseq
      %v1151 = vshrl.u32 %v1150, 7
      %v1152 = vsub.s32 %v1149, %v1151
      %v1153 = vrot.slane %v1125, %v1152
      %v1154 = vcombine.low %v1132, %v1139
      %v1155 = vcombine.low %v1146, %v1153
      %v1157 = vunpack.c.l.s4 1966171168
      %v1158 = vunpack.c.0.s8 %v1157
      %v1159 = vlaneseq
      %v1160 = vshrl.u32 %v1159, 7
      %v1161 = vsub.s32 %v1158, %v1160
      %v1162 = vrot.slane %v1154, %v1161
      %v1164 = vunpack.c.l.s4 1966171168
      %v1165 = vunpack.c.0.s8 %v1164
      %v1166 = vlaneseq
      %v1167 = vshrl.u32 %v1166, 7
      %v1168 = vsub.s32 %v1165, %v1167
      %v1169 = vrot.slane %v1155, %v1168
      %v1170 = vcombine.low %v1162, %v1169
      %v1171 = vcombine.low %v750, %v758
      %v1172 = vcombine.low %v760, %v743
      %v1173 = vcombine.low %v757, %v759
      %v1174 = vcombine.low %v761, %v775
      %v1176 = vunpack.c.l.s4 1966171168
      %v1177 = vunpack.c.0.s8 %v1176
      %v1178 = vlaneseq
      %v1179 = vshrl.u32 %v1178, 7
      %v1180 = vsub.s32 %v1177, %v1179
      %v1181 = vrot.slane %v1171, %v1180
      %v1183 = vunpack.c.l.s4 1966171168
      %v1184 = vunpack.c.0.s8 %v1183
      %v1185 = vlaneseq
      %v1186 = vshrl.u32 %v1185, 7
      %v1187 = vsub.s32 %v1184, %v1186
      %v1188 = vrot.slane %v1172, %v1187
      %v1190 = vunpack.c.l.s4 1966171168
      %v1191 = vunpack.c.0.s8 %v1190
      %v1192 = vlaneseq
      %v1193 = vshrl.u32 %v1192, 7
      %v1194 = vsub.s32 %v1191, %v1193
      %v1195 = vrot.slane %v1173, %v1194
      %v1197 = vunpack.c.l.s4 1966171168
      %v1198 = vunpack.c.0.s8 %v1197
      %v1199 = vlaneseq
      %v1200 = vshrl.u32 %v1199, 7
      %v1201 = vsub.s32 %v1198, %v1200
      %v1202 = vrot.slane %v1174, %v1201
      %v1203 = vcombine.low %v1181, %v1188
      %v1204 = vcombine.low %v1195, %v1202
      %v1206 = vunpack.c.l.s4 1966171168
      %v1207 = vunpack.c.0.s8 %v1206
      %v1208 = vlaneseq
      %v1209 = vshrl.u32 %v1208, 7
      %v1210 = vsub.s32 %v1207, %v1209
      %v1211 = vrot.slane %v1203, %v1210
      %v1213 = vunpack.c.l.s4 1966171168
      %v1214 = vunpack.c.0.s8 %v1213
      %v1215 = vlaneseq
      %v1216 = vshrl.u32 %v1215, 7
      %v1217 = vsub.s32 %v1214, %v1216
      %v1218 = vrot.slane %v1204, %v1217
      %v1219 = vcombine.low %v1211, %v1218
      %vm1220 = vcmask 195584
      %v1221 = vsel %vm1220, %v827, 0
      %v1223 = vsel %vm1220, %v876, 0
      %v1225 = vsel %vm1220, %v925, 0
      %v1227 = vsel %vm1220, %v974, 0
      %v1229 = vsel %vm1220, %v1023, 0
      %v1231 = vsel %vm1220, %v1072, 0
      %v1233 = vsel %vm1220, %v1121, 0
      %v1235 = vsel %vm1220, %v1170, 0
      %v1237 = vsel %vm1220, %v1219, 0
      %1239 = vmatprep.subr.mxu0 0.0
      %1240 = vmatpush1.msra.mxu0 %v776
      %1241 = vmatprep.subr.mxu0 0.0
      %1242 = vmatpush1.msra.mxu0 %v777
      %1243 = vmatprep.subr.mxu0 0.0
      %1244 = vmatpush1.msra.mxu0 %v778
      %1245 = vmatprep.subr.mxu0 0.0
      %1246 = vmatpush1.msra.mxu0 0.0
      %1247 = vmatprep.subr.mxu0 0.0
      %1248 = vmatpush1.msra.mxu0 0.0
      %1249 = vmatprep.subr.mxu0 0.0
      %1250 = vmatpush1.msra.mxu0 0.0
      %1251 = vmatprep.subr.mxu0 0.0
      %1252 = vmatpush1.msra.mxu0 0.0
      %1253 = vmatprep.subr.mxu0 0.0
      %1254 = vmatpush1.msra.mxu0 0.0
      %1255 = vmatprep.subr.mxu0 0.0
      %1256 = vmatpush1.msra.mxu0 0.0
      %1257 = vmatprep.subr.mxu0 0.0
      %1258 = vmatpush1.msra.mxu0 0.0
      %1259 = vmatprep.subr.mxu0 0.0
      %1260 = vmatpush1.msra.mxu0 0.0
      %1261 = vmatprep.subr.mxu0 0.0
      %1262 = vmatpush1.msra.mxu0 0.0
      %1263 = vmatprep.subr.mxu0 0.0
      %1264 = vmatpush1.msra.mxu0 0.0
      %1265 = vmatprep.subr.mxu0 0.0
      %1266 = vmatpush1.msra.mxu0 0.0
      %1267 = vmatprep.subr.mxu0 0.0
      %1268 = vmatpush1.msra.mxu0 0.0
      %1269 = vmatprep.subr.mxu0 0.0
      %1270 = vmatpush1.msra.mxu0 0.0
      %1271 = vmatprep.subr.mxu0 0.0
      %1272 = vmatpush1.msra.mxu0 0.0
      %1273 = vmatprep.subr.mxu0 0.0
      %1274 = vmatpush1.msra.mxu0 0.0
      %1275 = vmatprep.subr.mxu0 0.0
      %1276 = vmatpush1.msra.mxu0 0.0
      %1277 = vmatprep.subr.mxu0 0.0
      %1278 = vmatpush1.msra.mxu0 0.0
      %1279 = vmatprep.subr.mxu0 0.0
      %1280 = vmatpush1.msra.mxu0 0.0
      %1281 = vmatprep.subr.mxu0 0.0
      %1282 = vmatpush1.msra.mxu0 0.0
      %1283 = vmatprep.subr.mxu0 0.0
      %1284 = vmatpush1.msra.mxu0 0.0
      %1285 = vmatprep.subr.mxu0 0.0
      %1286 = vmatpush1.msra.mxu0 0.0
      %1287 = vmatprep.subr.mxu0 0.0
      %1288 = vmatpush1.msra.mxu0 0.0
      %1289 = vmatprep.subr.mxu0 0.0
      %1290 = vmatpush1.msra.mxu0 0.0
      %1291 = vmatprep.subr.mxu0 0.0
      %1292 = vmatpush1.msra.mxu0 0.0
      %1293 = vmatprep.subr.mxu0 0.0
      %1294 = vmatpush1.msra.mxu0 0.0
      %1295 = vmatprep.subr.mxu0 0.0
      %1296 = vmatpush1.msra.mxu0 0.0
      %1297 = vmatprep.subr.mxu0 0.0
      %1298 = vmatpush1.msra.mxu0 0.0
      %1299 = vmatprep.subr.mxu0 0.0
      %1300 = vmatpush1.msra.mxu0 0.0
      %1301 = vmatprep.subr.mxu0 0.0
      %1302 = vmatpush1.msra.mxu0 0.0
      %1303 = vmatprep.mubr.f32.mxu0 0.0
      %1304 = vmatmul.mubr.f32.gmra.mrb[0].mxu0 %v1221
      %v1305 = vpop.f32.mrb[0].mxu0
      %v1306 = vadd.f32 0.0, %v1305
      %v1307 = vpop.f32.mrb[0].mxu0
      %1308 = vmatprep.mubr.f32.mxu0 0.0
      %1309 = vmatmul.mubr.f32.gmra.mrb[0].mxu0 %v1223
      %v1310 = vpop.f32.mrb[0].mxu0
      %v1311 = vadd.f32 0.0, %v1310
      %v1312 = vpop.f32.mrb[0].mxu0
      %1313 = vmatprep.mubr.f32.mxu0 0.0
      %1314 = vmatmul.mubr.f32.gmra.mrb[0].mxu0 %v1225
      %v1315 = vpop.f32.mrb[0].mxu0
      %v1316 = vadd.f32 0.0, %v1315
      %v1317 = vpop.f32.mrb[0].mxu0
      %1318 = vmatprep.mubr.f32.mxu0 0.0
      %1319 = vmatmul.mubr.f32.gmra.mrb[0].mxu0 %v1227
      %v1320 = vpop.f32.mrb[0].mxu0
      %v1321 = vadd.f32 0.0, %v1320
      %v1322 = vpop.f32.mrb[0].mxu0
      %1323 = vmatprep.mubr.f32.mxu0 0.0
      %1324 = vmatmul.mubr.f32.gmra.mrb[0].mxu0 %v1229
      %v1325 = vpop.f32.mrb[0].mxu0
      %v1326 = vadd.f32 0.0, %v1325
      %v1327 = vpop.f32.mrb[0].mxu0
      %1328 = vmatprep.mubr.f32.mxu0 0.0
      %1329 = vmatmul.mubr.f32.gmra.mrb[0].mxu0 %v1231
      %v1330 = vpop.f32.mrb[0].mxu0
      %v1331 = vadd.f32 0.0, %v1330
      %v1332 = vpop.f32.mrb[0].mxu0
      %1333 = vmatprep.mubr.f32.mxu0 0.0
      %1334 = vmatmul.mubr.f32.gmra.mrb[0].mxu0 %v1233
      %v1335 = vpop.f32.mrb[0].mxu0
      %v1336 = vadd.f32 0.0, %v1335
      %v1337 = vpop.f32.mrb[0].mxu0
      %1338 = vmatprep.mubr.f32.mxu0 0.0
      %1339 = vmatmul.mubr.f32.gmra.mrb[0].mxu0 %v1235
      %v1340 = vpop.f32.mrb[0].mxu0
      %v1341 = vadd.f32 0.0, %v1340
      %v1342 = vpop.f32.mrb[0].mxu0
      %1343 = vmatprep.mubr.f32.mxu0 0.0
      %1344 = vmatmul.mubr.f32.gmra.mrb[0].mxu0 %v1237
      %v1345 = vpop.f32.mrb[0].mxu0
      %v1346 = vadd.f32 0.0, %v1345
      %v1347 = vpop.f32.mrb[0].mxu0
      %1348 = vdwg.mxu0
      %v1358 = vcombine.high %v1306, %v1306
      %v1360 = vunpack.c.l.s4 1966171168
      %v1361 = vunpack.c.0.s8 %v1360
      %v1362 = vlaneseq
      %v1363 = vshrl.u32 %v1362, 7
      %v1364 = vsub.s32 %v1361, %v1363
      %v1365 = vrot.slane %v1306, %v1364
      %v1367 = vunpack.c.l.s4 1966171168
      %v1368 = vunpack.c.0.s8 %v1367
      %v1369 = vlaneseq
      %v1370 = vshrl.u32 %v1369, 7
      %v1371 = vsub.s32 %v1368, %v1370
      %v1372 = vrot.slane %v1358, %v1371
      %v1373 = vcombine.high %v1365, %v1365
      %v1374 = vcombine.high %v1372, %v1372
      %v1376 = vunpack.c.l.s4 1966171168
      %v1377 = vunpack.c.0.s8 %v1376
      %v1378 = vlaneseq
      %v1379 = vshrl.u32 %v1378, 7
      %v1380 = vsub.s32 %v1377, %v1379
      %v1381 = vrot.slane %v1365, %v1380
      %v1383 = vunpack.c.l.s4 1966171168
      %v1384 = vunpack.c.0.s8 %v1383
      %v1385 = vlaneseq
      %v1386 = vshrl.u32 %v1385, 7
      %v1387 = vsub.s32 %v1384, %v1386
      %v1388 = vrot.slane %v1372, %v1387
      %v1390 = vunpack.c.l.s4 1966171168
      %v1391 = vunpack.c.0.s8 %v1390
      %v1392 = vlaneseq
      %v1393 = vshrl.u32 %v1392, 7
      %v1394 = vsub.s32 %v1391, %v1393
      %v1395 = vrot.slane %v1373, %v1394
      %v1397 = vunpack.c.l.s4 1966171168
      %v1398 = vunpack.c.0.s8 %v1397
      %v1399 = vlaneseq
      %v1400 = vshrl.u32 %v1399, 7
      %v1401 = vsub.s32 %v1398, %v1400
      %v1402 = vrot.slane %v1374, %v1401
      %v1403 = vcombine.high %v1381, %v1381
      %v1404 = vcombine.high %v1388, %v1388
      %v1405 = vcombine.high %v1395, %v1395
      %v1406 = vcombine.high %v1402, %v1402
      %v1407 = vcombine.high %v1311, %v1311
      %v1409 = vunpack.c.l.s4 1966171168
      %v1410 = vunpack.c.0.s8 %v1409
      %v1411 = vlaneseq
      %v1412 = vshrl.u32 %v1411, 7
      %v1413 = vsub.s32 %v1410, %v1412
      %v1414 = vrot.slane %v1311, %v1413
      %v1416 = vunpack.c.l.s4 1966171168
      %v1417 = vunpack.c.0.s8 %v1416
      %v1418 = vlaneseq
      %v1419 = vshrl.u32 %v1418, 7
      %v1420 = vsub.s32 %v1417, %v1419
      %v1421 = vrot.slane %v1407, %v1420
      %v1422 = vcombine.high %v1414, %v1414
      %v1423 = vcombine.high %v1421, %v1421
      %v1425 = vunpack.c.l.s4 1966171168
      %v1426 = vunpack.c.0.s8 %v1425
      %v1427 = vlaneseq
      %v1428 = vshrl.u32 %v1427, 7
      %v1429 = vsub.s32 %v1426, %v1428
      %v1430 = vrot.slane %v1414, %v1429
      %v1432 = vunpack.c.l.s4 1966171168
      %v1433 = vunpack.c.0.s8 %v1432
      %v1434 = vlaneseq
      %v1435 = vshrl.u32 %v1434, 7
      %v1436 = vsub.s32 %v1433, %v1435
      %v1437 = vrot.slane %v1421, %v1436
      %v1439 = vunpack.c.l.s4 1966171168
      %v1440 = vunpack.c.0.s8 %v1439
      %v1441 = vlaneseq
      %v1442 = vshrl.u32 %v1441, 7
      %v1443 = vsub.s32 %v1440, %v1442
      %v1444 = vrot.slane %v1422, %v1443
      %v1446 = vunpack.c.l.s4 1966171168
      %v1447 = vunpack.c.0.s8 %v1446
      %v1448 = vlaneseq
      %v1449 = vshrl.u32 %v1448, 7
      %v1450 = vsub.s32 %v1447, %v1449
      %v1451 = vrot.slane %v1423, %v1450
      %v1452 = vcombine.high %v1430, %v1430
      %v1453 = vcombine.high %v1437, %v1437
      %v1454 = vcombine.high %v1444, %v1444
      %v1455 = vcombine.high %v1451, %v1451
      %v1456 = vcombine.high %v1316, %v1316
      %v1458 = vunpack.c.l.s4 1966171168
      %v1459 = vunpack.c.0.s8 %v1458
      %v1460 = vlaneseq
      %v1461 = vshrl.u32 %v1460, 7
      %v1462 = vsub.s32 %v1459, %v1461
      %v1463 = vrot.slane %v1316, %v1462
      %v1465 = vunpack.c.l.s4 1966171168
      %v1466 = vunpack.c.0.s8 %v1465
      %v1467 = vlaneseq
      %v1468 = vshrl.u32 %v1467, 7
      %v1469 = vsub.s32 %v1466, %v1468
      %v1470 = vrot.slane %v1456, %v1469
      %v1471 = vcombine.high %v1463, %v1463
      %v1472 = vcombine.high %v1470, %v1470
      %v1474 = vunpack.c.l.s4 1966171168
      %v1475 = vunpack.c.0.s8 %v1474
      %v1476 = vlaneseq
      %v1477 = vshrl.u32 %v1476, 7
      %v1478 = vsub.s32 %v1475, %v1477
      %v1479 = vrot.slane %v1463, %v1478
      %v1481 = vunpack.c.l.s4 1966171168
      %v1482 = vunpack.c.0.s8 %v1481
      %v1483 = vlaneseq
      %v1484 = vshrl.u32 %v1483, 7
      %v1485 = vsub.s32 %v1482, %v1484
      %v1486 = vrot.slane %v1470, %v1485
      %v1488 = vunpack.c.l.s4 1966171168
      %v1489 = vunpack.c.0.s8 %v1488
      %v1490 = vlaneseq
      %v1491 = vshrl.u32 %v1490, 7
      %v1492 = vsub.s32 %v1489, %v1491
      %v1493 = vrot.slane %v1471, %v1492
      %v1495 = vunpack.c.l.s4 1966171168
      %v1496 = vunpack.c.0.s8 %v1495
      %v1497 = vlaneseq
      %v1498 = vshrl.u32 %v1497, 7
      %v1499 = vsub.s32 %v1496, %v1498
      %v1500 = vrot.slane %v1472, %v1499
      %v1501 = vcombine.high %v1479, %v1479
      %v1502 = vcombine.high %v1486, %v1486
      %v1503 = vcombine.high %v1493, %v1493
      %v1504 = vcombine.high %v1500, %v1500
      %v1505 = vcombine.high %v1321, %v1321
      %v1507 = vunpack.c.l.s4 1966171168
      %v1508 = vunpack.c.0.s8 %v1507
      %v1509 = vlaneseq
      %v1510 = vshrl.u32 %v1509, 7
      %v1511 = vsub.s32 %v1508, %v1510
      %v1512 = vrot.slane %v1321, %v1511
      %v1514 = vunpack.c.l.s4 1966171168
      %v1515 = vunpack.c.0.s8 %v1514
      %v1516 = vlaneseq
      %v1517 = vshrl.u32 %v1516, 7
      %v1518 = vsub.s32 %v1515, %v1517
      %v1519 = vrot.slane %v1505, %v1518
      %v1520 = vcombine.high %v1512, %v1512
      %v1521 = vcombine.high %v1519, %v1519
      %v1523 = vunpack.c.l.s4 1966171168
      %v1524 = vunpack.c.0.s8 %v1523
      %v1525 = vlaneseq
      %v1526 = vshrl.u32 %v1525, 7
      %v1527 = vsub.s32 %v1524, %v1526
      %v1528 = vrot.slane %v1512, %v1527
      %v1530 = vunpack.c.l.s4 1966171168
      %v1531 = vunpack.c.0.s8 %v1530
      %v1532 = vlaneseq
      %v1533 = vshrl.u32 %v1532, 7
      %v1534 = vsub.s32 %v1531, %v1533
      %v1535 = vrot.slane %v1519, %v1534
      %v1537 = vunpack.c.l.s4 1966171168
      %v1538 = vunpack.c.0.s8 %v1537
      %v1539 = vlaneseq
      %v1540 = vshrl.u32 %v1539, 7
      %v1541 = vsub.s32 %v1538, %v1540
      %v1542 = vrot.slane %v1520, %v1541
      %v1544 = vunpack.c.l.s4 1966171168
      %v1545 = vunpack.c.0.s8 %v1544
      %v1546 = vlaneseq
      %v1547 = vshrl.u32 %v1546, 7
      %v1548 = vsub.s32 %v1545, %v1547
      %v1549 = vrot.slane %v1521, %v1548
      %v1550 = vcombine.high %v1535, %v1535
      %v1551 = vcombine.high %v1542, %v1542
      %v1552 = vcombine.high %v1549, %v1549
      %v1553 = vcombine.high %v1326, %v1326
      %v1555 = vunpack.c.l.s4 1966171168
      %v1556 = vunpack.c.0.s8 %v1555
      %v1557 = vlaneseq
      %v1558 = vshrl.u32 %v1557, 7
      %v1559 = vsub.s32 %v1556, %v1558
      %v1560 = vrot.slane %v1326, %v1559
      %v1562 = vunpack.c.l.s4 1966171168
      %v1563 = vunpack.c.0.s8 %v1562
      %v1564 = vlaneseq
      %v1565 = vshrl.u32 %v1564, 7
      %v1566 = vsub.s32 %v1563, %v1565
      %v1567 = vrot.slane %v1553, %v1566
      %v1568 = vcombine.high %v1560, %v1560
      %v1569 = vcombine.high %v1567, %v1567
      %v1571 = vunpack.c.l.s4 1966171168
      %v1572 = vunpack.c.0.s8 %v1571
      %v1573 = vlaneseq
      %v1574 = vshrl.u32 %v1573, 7
      %v1575 = vsub.s32 %v1572, %v1574
      %v1576 = vrot.slane %v1560, %v1575
      %v1578 = vunpack.c.l.s4 1966171168
      %v1579 = vunpack.c.0.s8 %v1578
      %v1580 = vlaneseq
      %v1581 = vshrl.u32 %v1580, 7
      %v1582 = vsub.s32 %v1579, %v1581
      %v1583 = vrot.slane %v1567, %v1582
      %v1585 = vunpack.c.l.s4 1966171168
      %v1586 = vunpack.c.0.s8 %v1585
      %v1587 = vlaneseq
      %v1588 = vshrl.u32 %v1587, 7
      %v1589 = vsub.s32 %v1586, %v1588
      %v1590 = vrot.slane %v1568, %v1589
      %v1592 = vunpack.c.l.s4 1966171168
      %v1593 = vunpack.c.0.s8 %v1592
      %v1594 = vlaneseq
      %v1595 = vshrl.u32 %v1594, 7
      %v1596 = vsub.s32 %v1593, %v1595
      %v1597 = vrot.slane %v1569, %v1596
      %v1598 = vcombine.high %v1576, %v1576
      %v1599 = vcombine.high %v1583, %v1583
      %v1600 = vcombine.high %v1597, %v1597
      %v1601 = vcombine.high %v1331, %v1331
      %v1603 = vunpack.c.l.s4 1966171168
      %v1604 = vunpack.c.0.s8 %v1603
      %v1605 = vlaneseq
      %v1606 = vshrl.u32 %v1605, 7
      %v1607 = vsub.s32 %v1604, %v1606
      %v1608 = vrot.slane %v1331, %v1607
      %v1610 = vunpack.c.l.s4 1966171168
      %v1611 = vunpack.c.0.s8 %v1610
      %v1612 = vlaneseq
      %v1613 = vshrl.u32 %v1612, 7
      %v1614 = vsub.s32 %v1611, %v1613
      %v1615 = vrot.slane %v1601, %v1614
      %v1616 = vcombine.high %v1608, %v1608
      %v1617 = vcombine.high %v1615, %v1615
      %v1619 = vunpack.c.l.s4 1966171168
      %v1620 = vunpack.c.0.s8 %v1619
      %v1621 = vlaneseq
      %v1622 = vshrl.u32 %v1621, 7
      %v1623 = vsub.s32 %v1620, %v1622
      %v1624 = vrot.slane %v1608, %v1623
      %v1626 = vunpack.c.l.s4 1966171168
      %v1627 = vunpack.c.0.s8 %v1626
      %v1628 = vlaneseq
      %v1629 = vshrl.u32 %v1628, 7
      %v1630 = vsub.s32 %v1627, %v1629
      %v1631 = vrot.slane %v1615, %v1630
      %v1633 = vunpack.c.l.s4 1966171168
      %v1634 = vunpack.c.0.s8 %v1633
      %v1635 = vlaneseq
      %v1636 = vshrl.u32 %v1635, 7
      %v1637 = vsub.s32 %v1634, %v1636
      %v1638 = vrot.slane %v1616, %v1637
      %v1640 = vunpack.c.l.s4 1966171168
      %v1641 = vunpack.c.0.s8 %v1640
      %v1642 = vlaneseq
      %v1643 = vshrl.u32 %v1642, 7
      %v1644 = vsub.s32 %v1641, %v1643
      %v1645 = vrot.slane %v1617, %v1644
      %v1646 = vcombine.high %v1624, %v1624
      %v1647 = vcombine.high %v1631, %v1631
      %v1648 = vcombine.high %v1638, %v1638
      %v1649 = vcombine.high %v1645, %v1645
      %v1650 = vcombine.high %v1336, %v1336
      %v1652 = vunpack.c.l.s4 1966171168
      %v1653 = vunpack.c.0.s8 %v1652
      %v1654 = vlaneseq
      %v1655 = vshrl.u32 %v1654, 7
      %v1656 = vsub.s32 %v1653, %v1655
      %v1657 = vrot.slane %v1336, %v1656
      %v1659 = vunpack.c.l.s4 1966171168
      %v1660 = vunpack.c.0.s8 %v1659
      %v1661 = vlaneseq
      %v1662 = vshrl.u32 %v1661, 7
      %v1663 = vsub.s32 %v1660, %v1662
      %v1664 = vrot.slane %v1650, %v1663
      %v1665 = vcombine.high %v1657, %v1657
      %v1666 = vcombine.high %v1664, %v1664
      %v1668 = vunpack.c.l.s4 1966171168
      %v1669 = vunpack.c.0.s8 %v1668
      %v1670 = vlaneseq
      %v1671 = vshrl.u32 %v1670, 7
      %v1672 = vsub.s32 %v1669, %v1671
      %v1673 = vrot.slane %v1657, %v1672
      %v1675 = vunpack.c.l.s4 1966171168
      %v1676 = vunpack.c.0.s8 %v1675
      %v1677 = vlaneseq
      %v1678 = vshrl.u32 %v1677, 7
      %v1679 = vsub.s32 %v1676, %v1678
      %v1680 = vrot.slane %v1664, %v1679
      %v1682 = vunpack.c.l.s4 1966171168
      %v1683 = vunpack.c.0.s8 %v1682
      %v1684 = vlaneseq
      %v1685 = vshrl.u32 %v1684, 7
      %v1686 = vsub.s32 %v1683, %v1685
      %v1687 = vrot.slane %v1665, %v1686
      %v1689 = vunpack.c.l.s4 1966171168
      %v1690 = vunpack.c.0.s8 %v1689
      %v1691 = vlaneseq
      %v1692 = vshrl.u32 %v1691, 7
      %v1693 = vsub.s32 %v1690, %v1692
      %v1694 = vrot.slane %v1666, %v1693
      %v1695 = vcombine.high %v1673, %v1673
      %v1696 = vcombine.high %v1680, %v1680
      %v1697 = vcombine.high %v1687, %v1687
      %v1698 = vcombine.high %v1694, %v1694
      %v1699 = vcombine.high %v1341, %v1341
      %v1701 = vunpack.c.l.s4 1966171168
      %v1702 = vunpack.c.0.s8 %v1701
      %v1703 = vlaneseq
      %v1704 = vshrl.u32 %v1703, 7
      %v1705 = vsub.s32 %v1702, %v1704
      %v1706 = vrot.slane %v1341, %v1705
      %v1708 = vunpack.c.l.s4 1966171168
      %v1709 = vunpack.c.0.s8 %v1708
      %v1710 = vlaneseq
      %v1711 = vshrl.u32 %v1710, 7
      %v1712 = vsub.s32 %v1709, %v1711
      %v1713 = vrot.slane %v1699, %v1712
      %v1714 = vcombine.high %v1706, %v1706
      %v1715 = vcombine.high %v1713, %v1713
      %v1717 = vunpack.c.l.s4 1966171168
      %v1718 = vunpack.c.0.s8 %v1717
      %v1719 = vlaneseq
      %v1720 = vshrl.u32 %v1719, 7
      %v1721 = vsub.s32 %v1718, %v1720
      %v1722 = vrot.slane %v1706, %v1721
      %v1724 = vunpack.c.l.s4 1966171168
      %v1725 = vunpack.c.0.s8 %v1724
      %v1726 = vlaneseq
      %v1727 = vshrl.u32 %v1726, 7
      %v1728 = vsub.s32 %v1725, %v1727
      %v1729 = vrot.slane %v1713, %v1728
      %v1731 = vunpack.c.l.s4 1966171168
      %v1732 = vunpack.c.0.s8 %v1731
      %v1733 = vlaneseq
      %v1734 = vshrl.u32 %v1733, 7
      %v1735 = vsub.s32 %v1732, %v1734
      %v1736 = vrot.slane %v1714, %v1735
      %v1738 = vunpack.c.l.s4 1966171168
      %v1739 = vunpack.c.0.s8 %v1738
      %v1740 = vlaneseq
      %v1741 = vshrl.u32 %v1740, 7
      %v1742 = vsub.s32 %v1739, %v1741
      %v1743 = vrot.slane %v1715, %v1742
      %v1744 = vcombine.high %v1722, %v1722
      %v1745 = vcombine.high %v1736, %v1736
      %v1746 = vcombine.high %v1743, %v1743
      %v1747 = vcombine.high %v1346, %v1346
      %v1749 = vunpack.c.l.s4 1966171168
      %v1750 = vunpack.c.0.s8 %v1749
      %v1751 = vlaneseq
      %v1752 = vshrl.u32 %v1751, 7
      %v1753 = vsub.s32 %v1750, %v1752
      %v1754 = vrot.slane %v1346, %v1753
      %v1756 = vunpack.c.l.s4 1966171168
      %v1757 = vunpack.c.0.s8 %v1756
      %v1758 = vlaneseq
      %v1759 = vshrl.u32 %v1758, 7
      %v1760 = vsub.s32 %v1757, %v1759
      %v1761 = vrot.slane %v1747, %v1760
      %v1762 = vcombine.high %v1754, %v1754
      %v1763 = vcombine.high %v1761, %v1761
      %v1765 = vunpack.c.l.s4 1966171168
      %v1766 = vunpack.c.0.s8 %v1765
      %v1767 = vlaneseq
      %v1768 = vshrl.u32 %v1767, 7
      %v1769 = vsub.s32 %v1766, %v1768
      %v1770 = vrot.slane %v1754, %v1769
      %v1772 = vunpack.c.l.s4 1966171168
      %v1773 = vunpack.c.0.s8 %v1772
      %v1774 = vlaneseq
      %v1775 = vshrl.u32 %v1774, 7
      %v1776 = vsub.s32 %v1773, %v1775
      %v1777 = vrot.slane %v1761, %v1776
      %v1779 = vunpack.c.l.s4 1966171168
      %v1780 = vunpack.c.0.s8 %v1779
      %v1781 = vlaneseq
      %v1782 = vshrl.u32 %v1781, 7
      %v1783 = vsub.s32 %v1780, %v1782
      %v1784 = vrot.slane %v1762, %v1783
      %v1786 = vunpack.c.l.s4 1966171168
      %v1787 = vunpack.c.0.s8 %v1786
      %v1788 = vlaneseq
      %v1789 = vshrl.u32 %v1788, 7
      %v1790 = vsub.s32 %v1787, %v1789
      %v1791 = vrot.slane %v1763, %v1790
      %v1792 = vcombine.high %v1770, %v1770
      %v1793 = vcombine.high %v1777, %v1777
      %v1794 = vcombine.high %v1784, %v1784
      %vm1859 = vcmask 1046528
      %v1860 = vrot.slane %v240, 1
      %v1861 = vrot.slane %v241, 1
      %v1862 = vsel %vm1859, %v1860, %v1861
      %v1863 = vrot.slane %v242, 1
      %v1864 = vrot.slane %v243, 1
      %v1865 = vsel %vm1859, %v1863, %v1864
      %v1866 = vrot.slane %v244, 1
      %v1867 = vrot.slane %v245, 1
      %v1868 = vsel %vm1859, %v1866, %v1867
      %v1869 = vrot.slane %v246, 1
      %v1870 = vrot.slane %v247, 1
      %v1871 = vsel %vm1859, %v1869, %v1870
      %v1872 = vrot.slane %v248, 1
      %v1873 = vrot.slane %v249, 1
      %v1874 = vsel %vm1859, %v1872, %v1873
      %v1875 = vrot.slane %v250, 1
      %v1876 = vrot.slane %v251, 1
      %v1877 = vsel %vm1859, %v1875, %v1876
      %v1878 = vrot.slane %v252, 1
      %v1879 = vrot.slane %v253, 1
      %v1880 = vsel %vm1859, %v1878, %v1879
      %v1881 = vrot.slane %v254, 1
      %v1882 = vrot.slane %v255, 1
      %v1883 = vsel %vm1859, %v1881, %v1882
      %v1884 = vld [vmem:[%s2] sm:$0xff]
      %v1885 = vld [vmem:[%s2 + $0x8] sm:$0xf]
      %vm1886 = vcmask 97280
      %v1887 = vsel %vm1886, %v1862, 0
      %v1889 = vsel %vm1886, %v1865, 0
      %v1891 = vsel %vm1886, %v1868, 0
      %v1893 = vsel %vm1886, %v1871, 0
      %v1895 = vsel %vm1886, %v1874, 0
      %v1897 = vsel %vm1886, %v1877, 0
      %v1899 = vsel %vm1886, %v1880, 0
      %v1901 = vsel %vm1886, %v1883, 0
      %vm1903 = vcmask 1043456
      %v1905 = vsel %vm1903, %v1885, 0
      %1907 = vmatprep.subr.mxu0 0.0
      %1908 = vmatpush1.msra.mxu0 %v1884
      %1909 = vmatprep.subr.mxu0 0.0
      %1910 = vmatpush1.msra.mxu0 %v1905
      %1911 = vmatprep.subr.mxu0 0.0
      %1912 = vmatpush1.msra.mxu0 0.0
      %1913 = vmatprep.subr.mxu0 0.0
      %1914 = vmatpush1.msra.mxu0 0.0
      %1915 = vmatprep.subr.mxu0 0.0
      %1916 = vmatpush1.msra.mxu0 0.0
      %1917 = vmatprep.subr.mxu0 0.0
      %1918 = vmatpush1.msra.mxu0 0.0
      %1919 = vmatprep.subr.mxu0 0.0
      %1920 = vmatpush1.msra.mxu0 0.0
      %1921 = vmatprep.subr.mxu0 0.0
      %1922 = vmatpush1.msra.mxu0 0.0
      %1923 = vmatprep.subr.mxu0 0.0
      %1924 = vmatpush1.msra.mxu0 0.0
      %1925 = vmatprep.subr.mxu0 0.0
      %1926 = vmatpush1.msra.mxu0 0.0
      %1927 = vmatprep.subr.mxu0 0.0
      %1928 = vmatpush1.msra.mxu0 0.0
      %1929 = vmatprep.subr.mxu0 0.0
      %1930 = vmatpush1.msra.mxu0 0.0
      %1931 = vmatprep.subr.mxu0 0.0
      %1932 = vmatpush1.msra.mxu0 0.0
      %1933 = vmatprep.subr.mxu0 0.0
      %1934 = vmatpush1.msra.mxu0 0.0
      %1935 = vmatprep.subr.mxu0 0.0
      %1936 = vmatpush1.msra.mxu0 0.0
      %1937 = vmatprep.subr.mxu0 0.0
      %1938 = vmatpush1.msra.mxu0 0.0
      %1939 = vmatprep.subr.mxu0 0.0
      %1940 = vmatpush1.msra.mxu0 0.0
      %1941 = vmatprep.subr.mxu0 0.0
      %1942 = vmatpush1.msra.mxu0 0.0
      %1943 = vmatprep.subr.mxu0 0.0
      %1944 = vmatpush1.msra.mxu0 0.0
      %1945 = vmatprep.subr.mxu0 0.0
      %1946 = vmatpush1.msra.mxu0 0.0
      %1947 = vmatprep.subr.mxu0 0.0
      %1948 = vmatpush1.msra.mxu0 0.0
      %1949 = vmatprep.subr.mxu0 0.0
      %1950 = vmatpush1.msra.mxu0 0.0
      %1951 = vmatprep.subr.mxu0 0.0
      %1952 = vmatpush1.msra.mxu0 0.0
      %1953 = vmatprep.subr.mxu0 0.0
      %1954 = vmatpush1.msra.mxu0 0.0
      %1955 = vmatprep.subr.mxu0 0.0
      %1956 = vmatpush1.msra.mxu0 0.0
      %1957 = vmatprep.subr.mxu0 0.0
      %1958 = vmatpush1.msra.mxu0 0.0
      %1959 = vmatprep.subr.mxu0 0.0
      %1960 = vmatpush1.msra.mxu0 0.0
      %1961 = vmatprep.subr.mxu0 0.0
      %1962 = vmatpush1.msra.mxu0 0.0
      %1963 = vmatprep.subr.mxu0 0.0
      %1964 = vmatpush1.msra.mxu0 0.0
      %1965 = vmatprep.subr.mxu0 0.0
      %1966 = vmatpush1.msra.mxu0 0.0
      %1967 = vmatprep.subr.mxu0 0.0
      %1968 = vmatpush1.msra.mxu0 0.0
      %1969 = vmatprep.subr.mxu0 0.0
      %1970 = vmatpush1.msra.mxu0 0.0
      %1971 = vmatprep.mubr.f32.mxu0 0.0
      %1972 = vmatmul.mubr.f32.gmra.mrb[0].mxu0 %v1887
      %v1973 = vpop.f32.mrb[0].mxu0
      %v1974 = vadd.f32 0.0, %v1973
      %v1975 = vpop.f32.mrb[0].mxu0
      %1976 = vmatprep.mubr.f32.mxu0 0.0
      %1977 = vmatmul.mubr.f32.gmra.mrb[0].mxu0 %v1889
      %v1978 = vpop.f32.mrb[0].mxu0
      %v1979 = vadd.f32 0.0, %v1978
      %v1980 = vpop.f32.mrb[0].mxu0
      %1981 = vmatprep.mubr.f32.mxu0 0.0
      %1982 = vmatmul.mubr.f32.gmra.mrb[0].mxu0 %v1891
      %v1983 = vpop.f32.mrb[0].mxu0
      %v1984 = vadd.f32 0.0, %v1983
      %v1985 = vpop.f32.mrb[0].mxu0
      %1986 = vmatprep.mubr.f32.mxu0 0.0
      %1987 = vmatmul.mubr.f32.gmra.mrb[0].mxu0 %v1893
      %v1988 = vpop.f32.mrb[0].mxu0
      %v1989 = vadd.f32 0.0, %v1988
      %v1990 = vpop.f32.mrb[0].mxu0
      %1991 = vmatprep.mubr.f32.mxu0 0.0
      %1992 = vmatmul.mubr.f32.gmra.mrb[0].mxu0 %v1895
      %v1993 = vpop.f32.mrb[0].mxu0
      %v1994 = vadd.f32 0.0, %v1993
      %v1995 = vpop.f32.mrb[0].mxu0
      %1996 = vmatprep.mubr.f32.mxu0 0.0
      %1997 = vmatmul.mubr.f32.gmra.mrb[0].mxu0 %v1897
      %v1998 = vpop.f32.mrb[0].mxu0
      %v1999 = vadd.f32 0.0, %v1998
      %v2000 = vpop.f32.mrb[0].mxu0
      %2001 = vmatprep.mubr.f32.mxu0 0.0
      %2002 = vmatmul.mubr.f32.gmra.mrb[0].mxu0 %v1899
      %v2003 = vpop.f32.mrb[0].mxu0
      %v2004 = vadd.f32 0.0, %v2003
      %v2005 = vpop.f32.mrb[0].mxu0
      %2006 = vmatprep.mubr.f32.mxu0 0.0
      %2007 = vmatmul.mubr.f32.gmra.mrb[0].mxu0 %v1901
      %v2008 = vpop.f32.mrb[0].mxu0
      %v2009 = vadd.f32 0.0, %v2008
      %v2010 = vpop.f32.mrb[0].mxu0
      %2011 = vdwg.mxu0
      %v2020 = vcombine.high %v1974, %v1974
      %v2022 = vunpack.c.l.s4 1966171168
      %v2023 = vunpack.c.0.s8 %v2022
      %v2024 = vlaneseq
      %v2025 = vshrl.u32 %v2024, 7
      %v2026 = vsub.s32 %v2023, %v2025
      %v2027 = vrot.slane %v1974, %v2026
      %v2029 = vunpack.c.l.s4 1966171168
      %v2030 = vunpack.c.0.s8 %v2029
      %v2031 = vlaneseq
      %v2032 = vshrl.u32 %v2031, 7
      %v2033 = vsub.s32 %v2030, %v2032
      %v2034 = vrot.slane %v2020, %v2033
      %v2035 = vcombine.high %v2027, %v2027
      %v2036 = vcombine.high %v2034, %v2034
      %v2038 = vunpack.c.l.s4 1966171168
      %v2039 = vunpack.c.0.s8 %v2038
      %v2040 = vlaneseq
      %v2041 = vshrl.u32 %v2040, 7
      %v2042 = vsub.s32 %v2039, %v2041
      %v2043 = vrot.slane %v2027, %v2042
      %v2045 = vunpack.c.l.s4 1966171168
      %v2046 = vunpack.c.0.s8 %v2045
      %v2047 = vlaneseq
      %v2048 = vshrl.u32 %v2047, 7
      %v2049 = vsub.s32 %v2046, %v2048
      %v2050 = vrot.slane %v2034, %v2049
      %v2052 = vunpack.c.l.s4 1966171168
      %v2053 = vunpack.c.0.s8 %v2052
      %v2054 = vlaneseq
      %v2055 = vshrl.u32 %v2054, 7
      %v2056 = vsub.s32 %v2053, %v2055
      %v2057 = vrot.slane %v2035, %v2056
      %v2059 = vunpack.c.l.s4 1966171168
      %v2060 = vunpack.c.0.s8 %v2059
      %v2061 = vlaneseq
      %v2062 = vshrl.u32 %v2061, 7
      %v2063 = vsub.s32 %v2060, %v2062
      %v2064 = vrot.slane %v2036, %v2063
      %v2065 = vcombine.high %v2043, %v2043
      %v2066 = vcombine.high %v2050, %v2050
      %v2067 = vcombine.high %v2057, %v2057
      %v2068 = vcombine.high %v2064, %v2064
      %v2069 = vcombine.high %v1979, %v1979
      %v2071 = vunpack.c.l.s4 1966171168
      %v2072 = vunpack.c.0.s8 %v2071
      %v2073 = vlaneseq
      %v2074 = vshrl.u32 %v2073, 7
      %v2075 = vsub.s32 %v2072, %v2074
      %v2076 = vrot.slane %v1979, %v2075
      %v2078 = vunpack.c.l.s4 1966171168
      %v2079 = vunpack.c.0.s8 %v2078
      %v2080 = vlaneseq
      %v2081 = vshrl.u32 %v2080, 7
      %v2082 = vsub.s32 %v2079, %v2081
      %v2083 = vrot.slane %v2069, %v2082
      %v2084 = vcombine.high %v2076, %v2076
      %v2085 = vcombine.high %v2083, %v2083
      %v2087 = vunpack.c.l.s4 1966171168
      %v2088 = vunpack.c.0.s8 %v2087
      %v2089 = vlaneseq
      %v2090 = vshrl.u32 %v2089, 7
      %v2091 = vsub.s32 %v2088, %v2090
      %v2092 = vrot.slane %v2076, %v2091
      %v2094 = vunpack.c.l.s4 1966171168
      %v2095 = vunpack.c.0.s8 %v2094
      %v2096 = vlaneseq
      %v2097 = vshrl.u32 %v2096, 7
      %v2098 = vsub.s32 %v2095, %v2097
      %v2099 = vrot.slane %v2083, %v2098
      %v2101 = vunpack.c.l.s4 1966171168
      %v2102 = vunpack.c.0.s8 %v2101
      %v2103 = vlaneseq
      %v2104 = vshrl.u32 %v2103, 7
      %v2105 = vsub.s32 %v2102, %v2104
      %v2106 = vrot.slane %v2084, %v2105
      %v2108 = vunpack.c.l.s4 1966171168
      %v2109 = vunpack.c.0.s8 %v2108
      %v2110 = vlaneseq
      %v2111 = vshrl.u32 %v2110, 7
      %v2112 = vsub.s32 %v2109, %v2111
      %v2113 = vrot.slane %v2085, %v2112
      %v2114 = vcombine.high %v2092, %v2092
      %v2115 = vcombine.high %v2099, %v2099
      %v2116 = vcombine.high %v2106, %v2106
      %v2117 = vcombine.high %v2113, %v2113
      %v2118 = vcombine.high %v1984, %v1984
      %v2120 = vunpack.c.l.s4 1966171168
      %v2121 = vunpack.c.0.s8 %v2120
      %v2122 = vlaneseq
      %v2123 = vshrl.u32 %v2122, 7
      %v2124 = vsub.s32 %v2121, %v2123
      %v2125 = vrot.slane %v1984, %v2124
      %v2127 = vunpack.c.l.s4 1966171168
      %v2128 = vunpack.c.0.s8 %v2127
      %v2129 = vlaneseq
      %v2130 = vshrl.u32 %v2129, 7
      %v2131 = vsub.s32 %v2128, %v2130
      %v2132 = vrot.slane %v2118, %v2131
      %v2133 = vcombine.high %v2125, %v2125
      %v2134 = vcombine.high %v2132, %v2132
      %v2136 = vunpack.c.l.s4 1966171168
      %v2137 = vunpack.c.0.s8 %v2136
      %v2138 = vlaneseq
      %v2139 = vshrl.u32 %v2138, 7
      %v2140 = vsub.s32 %v2137, %v2139
      %v2141 = vrot.slane %v2125, %v2140
      %v2143 = vunpack.c.l.s4 1966171168
      %v2144 = vunpack.c.0.s8 %v2143
      %v2145 = vlaneseq
      %v2146 = vshrl.u32 %v2145, 7
      %v2147 = vsub.s32 %v2144, %v2146
      %v2148 = vrot.slane %v2132, %v2147
      %v2150 = vunpack.c.l.s4 1966171168
      %v2151 = vunpack.c.0.s8 %v2150
      %v2152 = vlaneseq
      %v2153 = vshrl.u32 %v2152, 7
      %v2154 = vsub.s32 %v2151, %v2153
      %v2155 = vrot.slane %v2133, %v2154
      %v2157 = vunpack.c.l.s4 1966171168
      %v2158 = vunpack.c.0.s8 %v2157
      %v2159 = vlaneseq
      %v2160 = vshrl.u32 %v2159, 7
      %v2161 = vsub.s32 %v2158, %v2160
      %v2162 = vrot.slane %v2134, %v2161
      %v2163 = vcombine.high %v2141, %v2141
      %v2164 = vcombine.high %v2148, %v2148
      %v2165 = vcombine.high %v2155, %v2155
      %v2166 = vcombine.high %v2162, %v2162
      %v2167 = vcombine.high %v1989, %v1989
      %v2169 = vunpack.c.l.s4 1966171168
      %v2170 = vunpack.c.0.s8 %v2169
      %v2171 = vlaneseq
      %v2172 = vshrl.u32 %v2171, 7
      %v2173 = vsub.s32 %v2170, %v2172
      %v2174 = vrot.slane %v1989, %v2173
      %v2176 = vunpack.c.l.s4 1966171168
      %v2177 = vunpack.c.0.s8 %v2176
      %v2178 = vlaneseq
      %v2179 = vshrl.u32 %v2178, 7
      %v2180 = vsub.s32 %v2177, %v2179
      %v2181 = vrot.slane %v2167, %v2180
      %v2182 = vcombine.high %v2174, %v2174
      %v2183 = vcombine.high %v2181, %v2181
      %v2185 = vunpack.c.l.s4 1966171168
      %v2186 = vunpack.c.0.s8 %v2185
      %v2187 = vlaneseq
      %v2188 = vshrl.u32 %v2187, 7
      %v2189 = vsub.s32 %v2186, %v2188
      %v2190 = vrot.slane %v2174, %v2189
      %v2192 = vunpack.c.l.s4 1966171168
      %v2193 = vunpack.c.0.s8 %v2192
      %v2194 = vlaneseq
      %v2195 = vshrl.u32 %v2194, 7
      %v2196 = vsub.s32 %v2193, %v2195
      %v2197 = vrot.slane %v2181, %v2196
      %v2199 = vunpack.c.l.s4 1966171168
      %v2200 = vunpack.c.0.s8 %v2199
      %v2201 = vlaneseq
      %v2202 = vshrl.u32 %v2201, 7
      %v2203 = vsub.s32 %v2200, %v2202
      %v2204 = vrot.slane %v2182, %v2203
      %v2206 = vunpack.c.l.s4 1966171168
      %v2207 = vunpack.c.0.s8 %v2206
      %v2208 = vlaneseq
      %v2209 = vshrl.u32 %v2208, 7
      %v2210 = vsub.s32 %v2207, %v2209
      %v2211 = vrot.slane %v2183, %v2210
      %v2212 = vcombine.high %v2190, %v2190
      %v2213 = vcombine.high %v2197, %v2197
      %v2214 = vcombine.high %v2204, %v2204
      %v2215 = vcombine.high %v2211, %v2211
      %v2216 = vcombine.high %v1994, %v1994
      %v2218 = vunpack.c.l.s4 1966171168
      %v2219 = vunpack.c.0.s8 %v2218
      %v2220 = vlaneseq
      %v2221 = vshrl.u32 %v2220, 7
      %v2222 = vsub.s32 %v2219, %v2221
      %v2223 = vrot.slane %v1994, %v2222
      %v2225 = vunpack.c.l.s4 1966171168
      %v2226 = vunpack.c.0.s8 %v2225
      %v2227 = vlaneseq
      %v2228 = vshrl.u32 %v2227, 7
      %v2229 = vsub.s32 %v2226, %v2228
      %v2230 = vrot.slane %v2216, %v2229
      %v2231 = vcombine.high %v2223, %v2223
      %v2232 = vcombine.high %v2230, %v2230
      %v2234 = vunpack.c.l.s4 1966171168
      %v2235 = vunpack.c.0.s8 %v2234
      %v2236 = vlaneseq
      %v2237 = vshrl.u32 %v2236, 7
      %v2238 = vsub.s32 %v2235, %v2237
      %v2239 = vrot.slane %v2223, %v2238
      %v2241 = vunpack.c.l.s4 1966171168
      %v2242 = vunpack.c.0.s8 %v2241
      %v2243 = vlaneseq
      %v2244 = vshrl.u32 %v2243, 7
      %v2245 = vsub.s32 %v2242, %v2244
      %v2246 = vrot.slane %v2230, %v2245
      %v2248 = vunpack.c.l.s4 1966171168
      %v2249 = vunpack.c.0.s8 %v2248
      %v2250 = vlaneseq
      %v2251 = vshrl.u32 %v2250, 7
      %v2252 = vsub.s32 %v2249, %v2251
      %v2253 = vrot.slane %v2231, %v2252
      %v2255 = vunpack.c.l.s4 1966171168
      %v2256 = vunpack.c.0.s8 %v2255
      %v2257 = vlaneseq
      %v2258 = vshrl.u32 %v2257, 7
      %v2259 = vsub.s32 %v2256, %v2258
      %v2260 = vrot.slane %v2232, %v2259
      %v2261 = vcombine.high %v2239, %v2239
      %v2262 = vcombine.high %v2246, %v2246
      %v2263 = vcombine.high %v2253, %v2253
      %v2264 = vcombine.high %v2260, %v2260
      %v2265 = vcombine.high %v1999, %v1999
      %v2267 = vunpack.c.l.s4 1966171168
      %v2268 = vunpack.c.0.s8 %v2267
      %v2269 = vlaneseq
      %v2270 = vshrl.u32 %v2269, 7
      %v2271 = vsub.s32 %v2268, %v2270
      %v2272 = vrot.slane %v1999, %v2271
      %v2274 = vunpack.c.l.s4 1966171168
      %v2275 = vunpack.c.0.s8 %v2274
      %v2276 = vlaneseq
      %v2277 = vshrl.u32 %v2276, 7
      %v2278 = vsub.s32 %v2275, %v2277
      %v2279 = vrot.slane %v2265, %v2278
      %v2280 = vcombine.high %v2272, %v2272
      %v2281 = vcombine.high %v2279, %v2279
      %v2283 = vunpack.c.l.s4 1966171168
      %v2284 = vunpack.c.0.s8 %v2283
      %v2285 = vlaneseq
      %v2286 = vshrl.u32 %v2285, 7
      %v2287 = vsub.s32 %v2284, %v2286
      %v2288 = vrot.slane %v2272, %v2287
      %v2290 = vunpack.c.l.s4 1966171168
      %v2291 = vunpack.c.0.s8 %v2290
      %v2292 = vlaneseq
      %v2293 = vshrl.u32 %v2292, 7
      %v2294 = vsub.s32 %v2291, %v2293
      %v2295 = vrot.slane %v2279, %v2294
      %v2297 = vunpack.c.l.s4 1966171168
      %v2298 = vunpack.c.0.s8 %v2297
      %v2299 = vlaneseq
      %v2300 = vshrl.u32 %v2299, 7
      %v2301 = vsub.s32 %v2298, %v2300
      %v2302 = vrot.slane %v2280, %v2301
      %v2304 = vunpack.c.l.s4 1966171168
      %v2305 = vunpack.c.0.s8 %v2304
      %v2306 = vlaneseq
      %v2307 = vshrl.u32 %v2306, 7
      %v2308 = vsub.s32 %v2305, %v2307
      %v2309 = vrot.slane %v2281, %v2308
      %v2310 = vcombine.high %v2288, %v2288
      %v2311 = vcombine.high %v2295, %v2295
      %v2312 = vcombine.high %v2302, %v2302
      %v2313 = vcombine.high %v2309, %v2309
      %v2314 = vcombine.high %v2004, %v2004
      %v2316 = vunpack.c.l.s4 1966171168
      %v2317 = vunpack.c.0.s8 %v2316
      %v2318 = vlaneseq
      %v2319 = vshrl.u32 %v2318, 7
      %v2320 = vsub.s32 %v2317, %v2319
      %v2321 = vrot.slane %v2004, %v2320
      %v2323 = vunpack.c.l.s4 1966171168
      %v2324 = vunpack.c.0.s8 %v2323
      %v2325 = vlaneseq
      %v2326 = vshrl.u32 %v2325, 7
      %v2327 = vsub.s32 %v2324, %v2326
      %v2328 = vrot.slane %v2314, %v2327
      %v2329 = vcombine.high %v2321, %v2321
      %v2330 = vcombine.high %v2328, %v2328
      %v2332 = vunpack.c.l.s4 1966171168
      %v2333 = vunpack.c.0.s8 %v2332
      %v2334 = vlaneseq
      %v2335 = vshrl.u32 %v2334, 7
      %v2336 = vsub.s32 %v2333, %v2335
      %v2337 = vrot.slane %v2321, %v2336
      %v2339 = vunpack.c.l.s4 1966171168
      %v2340 = vunpack.c.0.s8 %v2339
      %v2341 = vlaneseq
      %v2342 = vshrl.u32 %v2341, 7
      %v2343 = vsub.s32 %v2340, %v2342
      %v2344 = vrot.slane %v2328, %v2343
      %v2346 = vunpack.c.l.s4 1966171168
      %v2347 = vunpack.c.0.s8 %v2346
      %v2348 = vlaneseq
      %v2349 = vshrl.u32 %v2348, 7
      %v2350 = vsub.s32 %v2347, %v2349
      %v2351 = vrot.slane %v2329, %v2350
      %v2353 = vunpack.c.l.s4 1966171168
      %v2354 = vunpack.c.0.s8 %v2353
      %v2355 = vlaneseq
      %v2356 = vshrl.u32 %v2355, 7
      %v2357 = vsub.s32 %v2354, %v2356
      %v2358 = vrot.slane %v2330, %v2357
      %v2359 = vcombine.high %v2337, %v2337
      %v2360 = vcombine.high %v2344, %v2344
      %v2361 = vcombine.high %v2351, %v2351
      %v2362 = vcombine.high %v2358, %v2358
      %v2363 = vcombine.high %v2009, %v2009
      %v2365 = vunpack.c.l.s4 1966171168
      %v2366 = vunpack.c.0.s8 %v2365
      %v2367 = vlaneseq
      %v2368 = vshrl.u32 %v2367, 7
      %v2369 = vsub.s32 %v2366, %v2368
      %v2370 = vrot.slane %v2009, %v2369
      %v2372 = vunpack.c.l.s4 1966171168
      %v2373 = vunpack.c.0.s8 %v2372
      %v2374 = vlaneseq
      %v2375 = vshrl.u32 %v2374, 7
      %v2376 = vsub.s32 %v2373, %v2375
      %v2377 = vrot.slane %v2363, %v2376
      %v2378 = vcombine.high %v2370, %v2370
      %v2379 = vcombine.high %v2377, %v2377
      %v2381 = vunpack.c.l.s4 1966171168
      %v2382 = vunpack.c.0.s8 %v2381
      %v2383 = vlaneseq
      %v2384 = vshrl.u32 %v2383, 7
      %v2385 = vsub.s32 %v2382, %v2384
      %v2386 = vrot.slane %v2370, %v2385
      %v2388 = vunpack.c.l.s4 1966171168
      %v2389 = vunpack.c.0.s8 %v2388
      %v2390 = vlaneseq
      %v2391 = vshrl.u32 %v2390, 7
      %v2392 = vsub.s32 %v2389, %v2391
      %v2393 = vrot.slane %v2377, %v2392
      %v2395 = vunpack.c.l.s4 1966171168
      %v2396 = vunpack.c.0.s8 %v2395
      %v2397 = vlaneseq
      %v2398 = vshrl.u32 %v2397, 7
      %v2399 = vsub.s32 %v2396, %v2398
      %v2400 = vrot.slane %v2378, %v2399
      %v2402 = vunpack.c.l.s4 1966171168
      %v2403 = vunpack.c.0.s8 %v2402
      %v2404 = vlaneseq
      %v2405 = vshrl.u32 %v2404, 7
      %v2406 = vsub.s32 %v2403, %v2405
      %v2407 = vrot.slane %v2379, %v2406
      %v2408 = vcombine.high %v2386, %v2386
      %v2409 = vcombine.high %v2393, %v2393
      %v2410 = vcombine.high %v2400, %v2400
      %v2411 = vcombine.high %v2407, %v2407
      %v2476 = vadd.f32 %v1381, %v2043
      %v2477 = vadd.f32 %v1395, %v2057
      %v2478 = vadd.f32 %v1403, %v2065
      %v2479 = vadd.f32 %v1405, %v2067
      %v2480 = vadd.f32 %v1388, %v2050
      %v2481 = vadd.f32 %v1402, %v2064
      %v2482 = vadd.f32 %v1404, %v2066
      %v2483 = vadd.f32 %v1406, %v2068
      %v2484 = vadd.f32 %v1444, %v2092
      %v2485 = vadd.f32 %v1452, %v2106
      %v2486 = vadd.f32 %v1454, %v2114
      %v2487 = vadd.f32 %v1437, %v2116
      %v2488 = vadd.f32 %v1451, %v2099
      %v2489 = vadd.f32 %v1453, %v2113
      %v2490 = vadd.f32 %v1455, %v2115
      %v2491 = vadd.f32 %v1479, %v2117
      %v2492 = vadd.f32 %v1501, %v2141
      %v2493 = vadd.f32 %v1503, %v2155
      %v2494 = vadd.f32 %v1486, %v2163
      %v2495 = vadd.f32 %v1500, %v2165
      %v2496 = vadd.f32 %v1502, %v2148
      %v2497 = vadd.f32 %v1504, %v2162
      %v2498 = vadd.f32 %v1528, %v2164
      %v2499 = vadd.f32 %v1542, %v2166
      %v2500 = vadd.f32 %v1551, %v2190
      %v2501 = vadd.f32 %v1535, %v2204
      %v2502 = vadd.f32 %v1549, %v2212
      %v2503 = vadd.f32 %v1550, %v2214
      %v2504 = vadd.f32 %v1552, %v2197
      %v2505 = vadd.f32 %v1576, %v2211
      %v2506 = vadd.f32 %v1590, %v2213
      %v2507 = vadd.f32 %v1598, %v2215
      %v2508 = vadd.f32 %v1583, %v2239
      %v2509 = vadd.f32 %v1597, %v2253
      %v2510 = vadd.f32 %v1599, %v2261
      %v2511 = vadd.f32 %v1600, %v2263
      %v2512 = vadd.f32 %v1624, %v2246
      %v2513 = vadd.f32 %v1638, %v2260
      %v2514 = vadd.f32 %v1646, %v2262
      %v2515 = vadd.f32 %v1648, %v2264
      %v2516 = vadd.f32 %v1645, %v2288
      %v2517 = vadd.f32 %v1647, %v2302
      %v2518 = vadd.f32 %v1649, %v2310
      %v2519 = vadd.f32 %v1673, %v2312
      %v2520 = vadd.f32 %v1687, %v2295
      %v2521 = vadd.f32 %v1695, %v2309
      %v2522 = vadd.f32 %v1697, %v2311
      %v2523 = vadd.f32 %v1680, %v2313
      %v2524 = vadd.f32 %v1696, %v2337
      %v2525 = vadd.f32 %v1698, %v2351
      %v2526 = vadd.f32 %v1722, %v2359
      %v2527 = vadd.f32 %v1736, %v2361
      %v2528 = vadd.f32 %v1744, %v2344
      %v2529 = vadd.f32 %v1745, %v2358
      %v2530 = vadd.f32 %v1729, %v2360
      %v2531 = vadd.f32 %v1743, %v2362
      %v2532 = vadd.f32 %v1746, %v2386
      %v2533 = vadd.f32 %v1770, %v2400
      %v2534 = vadd.f32 %v1784, %v2408
      %v2535 = vadd.f32 %v1792, %v2410
      %v2536 = vadd.f32 %v1794, %v2393
      %v2537 = vadd.f32 %v1777, %v2407
      %v2538 = vadd.f32 %v1791, %v2409
      %v2539 = vadd.f32 %v1793, %v2411
      %v2540 = vld [vmem:[%s3] sm:$0x1]
      %v2542 = vlaneseq
      %v2543 = vshrl.u32 %v2542, 7
      %v2544 = vsub.s32 0, %v2543
      %v2545 = vrot.slane %v2540, %v2544
      %v2546 = vcombine.high %v2545, %v2545
      %v2548 = vunpack.c.l.s4 1966171168
      %v2549 = vunpack.c.0.s8 %v2548
      %v2550 = vlaneseq
      %v2551 = vshrl.u32 %v2550, 7
      %v2552 = vsub.s32 %v2549, %v2551
      %v2553 = vrot.slane %v2545, %v2552
      %v2555 = vunpack.c.l.s4 1966171168
      %v2556 = vunpack.c.0.s8 %v2555
      %v2557 = vlaneseq
      %v2558 = vshrl.u32 %v2557, 7
      %v2559 = vsub.s32 %v2556, %v2558
      %v2560 = vrot.slane %v2546, %v2559
      %v2561 = vcombine.high %v2553, %v2553
      %v2562 = vcombine.high %v2560, %v2560
      %v2564 = vunpack.c.l.s4 1966171168
      %v2565 = vunpack.c.0.s8 %v2564
      %v2566 = vlaneseq
      %v2567 = vshrl.u32 %v2566, 7
      %v2568 = vsub.s32 %v2565, %v2567
      %v2569 = vrot.slane %v2553, %v2568
      %v2571 = vunpack.c.l.s4 1966171168
      %v2572 = vunpack.c.0.s8 %v2571
      %v2573 = vlaneseq
      %v2574 = vshrl.u32 %v2573, 7
      %v2575 = vsub.s32 %v2572, %v2574
      %v2576 = vrot.slane %v2560, %v2575
      %v2578 = vunpack.c.l.s4 1966171168
      %v2579 = vunpack.c.0.s8 %v2578
      %v2580 = vlaneseq
      %v2581 = vshrl.u32 %v2580, 7
      %v2582 = vsub.s32 %v2579, %v2581
      %v2583 = vrot.slane %v2561, %v2582
      %v2585 = vunpack.c.l.s4 1966171168
      %v2586 = vunpack.c.0.s8 %v2585
      %v2587 = vlaneseq
      %v2588 = vshrl.u32 %v2587, 7
      %v2589 = vsub.s32 %v2586, %v2588
      %v2590 = vrot.slane %v2562, %v2589
      %v2591 = vcombine.high %v2569, %v2569
      %v2592 = vcombine.high %v2576, %v2576
      %v2593 = vcombine.high %v2583, %v2583
      %v2594 = vcombine.high %v2590, %v2590
      %v2603 = vadd.f32 %v2476, %v2569
      %v2604 = vadd.f32 %v2477, %v2583
      %v2605 = vadd.f32 %v2478, %v2591
      %v2606 = vadd.f32 %v2479, %v2593
      %v2607 = vadd.f32 %v2480, %v2576
      %v2608 = vadd.f32 %v2481, %v2590
      %v2609 = vadd.f32 %v2482, %v2592
      %v2610 = vadd.f32 %v2483, %v2594
      %v2611 = vadd.f32 %v2484, %v2569
      %v2612 = vadd.f32 %v2485, %v2583
      %v2613 = vadd.f32 %v2486, %v2591
      %v2614 = vadd.f32 %v2487, %v2593
      %v2615 = vadd.f32 %v2488, %v2576
      %v2616 = vadd.f32 %v2489, %v2590
      %v2617 = vadd.f32 %v2490, %v2592
      %v2618 = vadd.f32 %v2491, %v2594
      %v2619 = vadd.f32 %v2492, %v2569
      %v2620 = vadd.f32 %v2493, %v2583
      %v2621 = vadd.f32 %v2494, %v2591
      %v2622 = vadd.f32 %v2495, %v2593
      %v2623 = vadd.f32 %v2496, %v2576
      %v2624 = vadd.f32 %v2497, %v2590
      %v2625 = vadd.f32 %v2498, %v2592
      %v2626 = vadd.f32 %v2499, %v2594
      %v2627 = vadd.f32 %v2500, %v2569
      %v2628 = vadd.f32 %v2501, %v2583
      %v2629 = vadd.f32 %v2502, %v2591
      %v2630 = vadd.f32 %v2503, %v2593
      %v2631 = vadd.f32 %v2504, %v2576
      %v2632 = vadd.f32 %v2505, %v2590
      %v2633 = vadd.f32 %v2506, %v2592
      %v2634 = vadd.f32 %v2507, %v2594
      %v2635 = vadd.f32 %v2508, %v2569
      %v2636 = vadd.f32 %v2509, %v2583
      %v2637 = vadd.f32 %v2510, %v2591
      %v2638 = vadd.f32 %v2511, %v2593
      %v2639 = vadd.f32 %v2512, %v2576
      %v2640 = vadd.f32 %v2513, %v2590
      %v2641 = vadd.f32 %v2514, %v2592
      %v2642 = vadd.f32 %v2515, %v2594
      %v2643 = vadd.f32 %v2516, %v2569
      %v2644 = vadd.f32 %v2517, %v2583
      %v2645 = vadd.f32 %v2518, %v2591
      %v2646 = vadd.f32 %v2519, %v2593
      %v2647 = vadd.f32 %v2520, %v2576
      %v2648 = vadd.f32 %v2521, %v2590
      %v2649 = vadd.f32 %v2522, %v2592
      %v2650 = vadd.f32 %v2523, %v2594
      %v2651 = vadd.f32 %v2524, %v2569
      %v2652 = vadd.f32 %v2525, %v2583
      %v2653 = vadd.f32 %v2526, %v2591
      %v2654 = vadd.f32 %v2527, %v2593
      %v2655 = vadd.f32 %v2528, %v2576
      %v2656 = vadd.f32 %v2529, %v2590
      %v2657 = vadd.f32 %v2530, %v2592
      %v2658 = vadd.f32 %v2531, %v2594
      %v2659 = vadd.f32 %v2532, %v2569
      %v2660 = vadd.f32 %v2533, %v2583
      %v2661 = vadd.f32 %v2534, %v2591
      %v2662 = vadd.f32 %v2535, %v2593
      %v2663 = vadd.f32 %v2536, %v2576
      %v2664 = vadd.f32 %v2537, %v2590
      %v2665 = vadd.f32 %v2538, %v2592
      %v2666 = vadd.f32 %v2539, %v2594
      %v2731 = vcombine.low %v2603, %v2604
      %v2732 = vcombine.low %v2605, %v2606
      %v2733 = vcombine.low %v2607, %v2608
      %v2734 = vcombine.low %v2609, %v2610
      %v2736 = vunpack.c.l.s4 1966171168
      %v2737 = vunpack.c.0.s8 %v2736
      %v2738 = vlaneseq
      %v2739 = vshrl.u32 %v2738, 7
      %v2740 = vsub.s32 %v2737, %v2739
      %v2741 = vrot.slane %v2731, %v2740
      %v2743 = vunpack.c.l.s4 1966171168
      %v2744 = vunpack.c.0.s8 %v2743
      %v2745 = vlaneseq
      %v2746 = vshrl.u32 %v2745, 7
      %v2747 = vsub.s32 %v2744, %v2746
      %v2748 = vrot.slane %v2732, %v2747
      %v2750 = vunpack.c.l.s4 1966171168
      %v2751 = vunpack.c.0.s8 %v2750
      %v2752 = vlaneseq
      %v2753 = vshrl.u32 %v2752, 7
      %v2754 = vsub.s32 %v2751, %v2753
      %v2755 = vrot.slane %v2733, %v2754
      %v2757 = vunpack.c.l.s4 1966171168
      %v2758 = vunpack.c.0.s8 %v2757
      %v2759 = vlaneseq
      %v2760 = vshrl.u32 %v2759, 7
      %v2761 = vsub.s32 %v2758, %v2760
      %v2762 = vrot.slane %v2734, %v2761
      %v2763 = vcombine.low %v2741, %v2748
      %v2764 = vcombine.low %v2755, %v2762
      %v2766 = vunpack.c.l.s4 1966171168
      %v2767 = vunpack.c.0.s8 %v2766
      %v2768 = vlaneseq
      %v2769 = vshrl.u32 %v2768, 7
      %v2770 = vsub.s32 %v2767, %v2769
      %v2771 = vrot.slane %v2763, %v2770
      %v2773 = vunpack.c.l.s4 1966171168
      %v2774 = vunpack.c.0.s8 %v2773
      %v2775 = vlaneseq
      %v2776 = vshrl.u32 %v2775, 7
      %v2777 = vsub.s32 %v2774, %v2776
      %v2778 = vrot.slane %v2764, %v2777
      %v2779 = vcombine.low %v2771, %v2778
      %v2780 = vcombine.low %v2611, %v2612
      %v2781 = vcombine.low %v2613, %v2614
      %v2782 = vcombine.low %v2615, %v2616
      %v2783 = vcombine.low %v2617, %v2618
      %v2785 = vunpack.c.l.s4 1966171168
      %v2786 = vunpack.c.0.s8 %v2785
      %v2787 = vlaneseq
      %v2788 = vshrl.u32 %v2787, 7
      %v2789 = vsub.s32 %v2786, %v2788
      %v2790 = vrot.slane %v2780, %v2789
      %v2792 = vunpack.c.l.s4 1966171168
      %v2793 = vunpack.c.0.s8 %v2792
      %v2794 = vlaneseq
      %v2795 = vshrl.u32 %v2794, 7
      %v2796 = vsub.s32 %v2793, %v2795
      %v2797 = vrot.slane %v2781, %v2796
      %v2799 = vunpack.c.l.s4 1966171168
      %v2800 = vunpack.c.0.s8 %v2799
      %v2801 = vlaneseq
      %v2802 = vshrl.u32 %v2801, 7
      %v2803 = vsub.s32 %v2800, %v2802
      %v2804 = vrot.slane %v2782, %v2803
      %v2806 = vunpack.c.l.s4 1966171168
      %v2807 = vunpack.c.0.s8 %v2806
      %v2808 = vlaneseq
      %v2809 = vshrl.u32 %v2808, 7
      %v2810 = vsub.s32 %v2807, %v2809
      %v2811 = vrot.slane %v2783, %v2810
      %v2812 = vcombine.low %v2790, %v2797
      %v2813 = vcombine.low %v2804, %v2811
      %v2815 = vunpack.c.l.s4 1966171168
      %v2816 = vunpack.c.0.s8 %v2815
      %v2817 = vlaneseq
      %v2818 = vshrl.u32 %v2817, 7
      %v2819 = vsub.s32 %v2816, %v2818
      %v2820 = vrot.slane %v2812, %v2819
      %v2822 = vunpack.c.l.s4 1966171168
      %v2823 = vunpack.c.0.s8 %v2822
      %v2824 = vlaneseq
      %v2825 = vshrl.u32 %v2824, 7
      %v2826 = vsub.s32 %v2823, %v2825
      %v2827 = vrot.slane %v2813, %v2826
      %v2828 = vcombine.low %v2820, %v2827
      %v2829 = vcombine.low %v2619, %v2620
      %v2830 = vcombine.low %v2621, %v2622
      %v2831 = vcombine.low %v2623, %v2624
      %v2832 = vcombine.low %v2625, %v2626
      %v2834 = vunpack.c.l.s4 1966171168
      %v2835 = vunpack.c.0.s8 %v2834
      %v2836 = vlaneseq
      %v2837 = vshrl.u32 %v2836, 7
      %v2838 = vsub.s32 %v2835, %v2837
      %v2839 = vrot.slane %v2829, %v2838
      %v2841 = vunpack.c.l.s4 1966171168
      %v2842 = vunpack.c.0.s8 %v2841
      %v2843 = vlaneseq
      %v2844 = vshrl.u32 %v2843, 7
      %v2845 = vsub.s32 %v2842, %v2844
      %v2846 = vrot.slane %v2830, %v2845
      %v2848 = vunpack.c.l.s4 1966171168
      %v2849 = vunpack.c.0.s8 %v2848
      %v2850 = vlaneseq
      %v2851 = vshrl.u32 %v2850, 7
      %v2852 = vsub.s32 %v2849, %v2851
      %v2853 = vrot.slane %v2831, %v2852
      %v2855 = vunpack.c.l.s4 1966171168
      %v2856 = vunpack.c.0.s8 %v2855
      %v2857 = vlaneseq
      %v2858 = vshrl.u32 %v2857, 7
      %v2859 = vsub.s32 %v2856, %v2858
      %v2860 = vrot.slane %v2832, %v2859
      %v2861 = vcombine.low %v2839, %v2846
      %v2862 = vcombine.low %v2853, %v2860
      %v2864 = vunpack.c.l.s4 1966171168
      %v2865 = vunpack.c.0.s8 %v2864
      %v2866 = vlaneseq
      %v2867 = vshrl.u32 %v2866, 7
      %v2868 = vsub.s32 %v2865, %v2867
      %v2869 = vrot.slane %v2861, %v2868
      %v2871 = vunpack.c.l.s4 1966171168
      %v2872 = vunpack.c.0.s8 %v2871
      %v2873 = vlaneseq
      %v2874 = vshrl.u32 %v2873, 7
      %v2875 = vsub.s32 %v2872, %v2874
      %v2876 = vrot.slane %v2862, %v2875
      %v2877 = vcombine.low %v2869, %v2876
      %v2878 = vcombine.low %v2627, %v2628
      %v2879 = vcombine.low %v2629, %v2630
      %v2880 = vcombine.low %v2631, %v2632
      %v2881 = vcombine.low %v2633, %v2634
      %v2883 = vunpack.c.l.s4 1966171168
      %v2884 = vunpack.c.0.s8 %v2883
      %v2885 = vlaneseq
      %v2886 = vshrl.u32 %v2885, 7
      %v2887 = vsub.s32 %v2884, %v2886
      %v2888 = vrot.slane %v2878, %v2887
      %v2890 = vunpack.c.l.s4 1966171168
      %v2891 = vunpack.c.0.s8 %v2890
      %v2892 = vlaneseq
      %v2893 = vshrl.u32 %v2892, 7
      %v2894 = vsub.s32 %v2891, %v2893
      %v2895 = vrot.slane %v2879, %v2894
      %v2897 = vunpack.c.l.s4 1966171168
      %v2898 = vunpack.c.0.s8 %v2897
      %v2899 = vlaneseq
      %v2900 = vshrl.u32 %v2899, 7
      %v2901 = vsub.s32 %v2898, %v2900
      %v2902 = vrot.slane %v2880, %v2901
      %v2904 = vunpack.c.l.s4 1966171168
      %v2905 = vunpack.c.0.s8 %v2904
      %v2906 = vlaneseq
      %v2907 = vshrl.u32 %v2906, 7
      %v2908 = vsub.s32 %v2905, %v2907
      %v2909 = vrot.slane %v2881, %v2908
      %v2910 = vcombine.low %v2888, %v2895
      %v2911 = vcombine.low %v2902, %v2909
      %v2913 = vunpack.c.l.s4 1966171168
      %v2914 = vunpack.c.0.s8 %v2913
      %v2915 = vlaneseq
      %v2916 = vshrl.u32 %v2915, 7
      %v2917 = vsub.s32 %v2914, %v2916
      %v2918 = vrot.slane %v2910, %v2917
      %v2920 = vunpack.c.l.s4 1966171168
      %v2921 = vunpack.c.0.s8 %v2920
      %v2922 = vlaneseq
      %v2923 = vshrl.u32 %v2922, 7
      %v2924 = vsub.s32 %v2921, %v2923
      %v2925 = vrot.slane %v2911, %v2924
      %v2926 = vcombine.low %v2918, %v2925
      %v2927 = vcombine.low %v2635, %v2636
      %v2928 = vcombine.low %v2637, %v2638
      %v2929 = vcombine.low %v2639, %v2640
      %v2930 = vcombine.low %v2641, %v2642
      %v2932 = vunpack.c.l.s4 1966171168
      %v2933 = vunpack.c.0.s8 %v2932
      %v2934 = vlaneseq
      %v2935 = vshrl.u32 %v2934, 7
      %v2936 = vsub.s32 %v2933, %v2935
      %v2937 = vrot.slane %v2927, %v2936
      %v2939 = vunpack.c.l.s4 1966171168
      %v2940 = vunpack.c.0.s8 %v2939
      %v2941 = vlaneseq
      %v2942 = vshrl.u32 %v2941, 7
      %v2943 = vsub.s32 %v2940, %v2942
      %v2944 = vrot.slane %v2928, %v2943
      %v2946 = vunpack.c.l.s4 1966171168
      %v2947 = vunpack.c.0.s8 %v2946
      %v2948 = vlaneseq
      %v2949 = vshrl.u32 %v2948, 7
      %v2950 = vsub.s32 %v2947, %v2949
      %v2951 = vrot.slane %v2929, %v2950
      %v2953 = vunpack.c.l.s4 1966171168
      %v2954 = vunpack.c.0.s8 %v2953
      %v2955 = vlaneseq
      %v2956 = vshrl.u32 %v2955, 7
      %v2957 = vsub.s32 %v2954, %v2956
      %v2958 = vrot.slane %v2930, %v2957
      %v2959 = vcombine.low %v2937, %v2944
      %v2960 = vcombine.low %v2951, %v2958
      %v2962 = vunpack.c.l.s4 1966171168
      %v2963 = vunpack.c.0.s8 %v2962
      %v2964 = vlaneseq
      %v2965 = vshrl.u32 %v2964, 7
      %v2966 = vsub.s32 %v2963, %v2965
      %v2967 = vrot.slane %v2959, %v2966
      %v2969 = vunpack.c.l.s4 1966171168
      %v2970 = vunpack.c.0.s8 %v2969
      %v2971 = vlaneseq
      %v2972 = vshrl.u32 %v2971, 7
      %v2973 = vsub.s32 %v2970, %v2972
      %v2974 = vrot.slane %v2960, %v2973
      %v2975 = vcombine.low %v2967, %v2974
      %v2976 = vcombine.low %v2643, %v2644
      %v2977 = vcombine.low %v2645, %v2646
      %v2978 = vcombine.low %v2647, %v2648
      %v2979 = vcombine.low %v2649, %v2650
      %v2981 = vunpack.c.l.s4 1966171168
      %v2982 = vunpack.c.0.s8 %v2981
      %v2983 = vlaneseq
      %v2984 = vshrl.u32 %v2983, 7
      %v2985 = vsub.s32 %v2982, %v2984
      %v2986 = vrot.slane %v2976, %v2985
      %v2988 = vunpack.c.l.s4 1966171168
      %v2989 = vunpack.c.0.s8 %v2988
      %v2990 = vlaneseq
      %v2991 = vshrl.u32 %v2990, 7
      %v2992 = vsub.s32 %v2989, %v2991
      %v2993 = vrot.slane %v2977, %v2992
      %v2995 = vunpack.c.l.s4 1966171168
      %v2996 = vunpack.c.0.s8 %v2995
      %v2997 = vlaneseq
      %v2998 = vshrl.u32 %v2997, 7
      %v2999 = vsub.s32 %v2996, %v2998
      %v3000 = vrot.slane %v2978, %v2999
      %v3002 = vunpack.c.l.s4 1966171168
      %v3003 = vunpack.c.0.s8 %v3002
      %v3004 = vlaneseq
      %v3005 = vshrl.u32 %v3004, 7
      %v3006 = vsub.s32 %v3003, %v3005
      %v3007 = vrot.slane %v2979, %v3006
      %v3008 = vcombine.low %v2986, %v2993
      %v3009 = vcombine.low %v3000, %v3007
      %v3011 = vunpack.c.l.s4 1966171168
      %v3012 = vunpack.c.0.s8 %v3011
      %v3013 = vlaneseq
      %v3014 = vshrl.u32 %v3013, 7
      %v3015 = vsub.s32 %v3012, %v3014
      %v3016 = vrot.slane %v3008, %v3015
      %v3018 = vunpack.c.l.s4 1966171168
      %v3019 = vunpack.c.0.s8 %v3018
      %v3020 = vlaneseq
      %v3021 = vshrl.u32 %v3020, 7
      %v3022 = vsub.s32 %v3019, %v3021
      %v3023 = vrot.slane %v3009, %v3022
      %v3024 = vcombine.low %v3016, %v3023
      %v3025 = vcombine.low %v2651, %v2652
      %v3026 = vcombine.low %v2653, %v2654
      %v3027 = vcombine.low %v2655, %v2656
      %v3028 = vcombine.low %v2657, %v2658
      %v3030 = vunpack.c.l.s4 1966171168
      %v3031 = vunpack.c.0.s8 %v3030
      %v3032 = vlaneseq
      %v3033 = vshrl.u32 %v3032, 7
      %v3034 = vsub.s32 %v3031, %v3033
      %v3035 = vrot.slane %v3025, %v3034
      %v3037 = vunpack.c.l.s4 1966171168
      %v3038 = vunpack.c.0.s8 %v3037
      %v3039 = vlaneseq
      %v3040 = vshrl.u32 %v3039, 7
      %v3041 = vsub.s32 %v3038, %v3040
      %v3042 = vrot.slane %v3026, %v3041
      %v3044 = vunpack.c.l.s4 1966171168
      %v3045 = vunpack.c.0.s8 %v3044
      %v3046 = vlaneseq
      %v3047 = vshrl.u32 %v3046, 7
      %v3048 = vsub.s32 %v3045, %v3047
      %v3049 = vrot.slane %v3027, %v3048
      %v3051 = vunpack.c.l.s4 1966171168
      %v3052 = vunpack.c.0.s8 %v3051
      %v3053 = vlaneseq
      %v3054 = vshrl.u32 %v3053, 7
      %v3055 = vsub.s32 %v3052, %v3054
      %v3056 = vrot.slane %v3028, %v3055
      %v3057 = vcombine.low %v3035, %v3042
      %v3058 = vcombine.low %v3049, %v3056
      %v3060 = vunpack.c.l.s4 1966171168
      %v3061 = vunpack.c.0.s8 %v3060
      %v3062 = vlaneseq
      %v3063 = vshrl.u32 %v3062, 7
      %v3064 = vsub.s32 %v3061, %v3063
      %v3065 = vrot.slane %v3057, %v3064
      %v3067 = vunpack.c.l.s4 1966171168
      %v3068 = vunpack.c.0.s8 %v3067
      %v3069 = vlaneseq
      %v3070 = vshrl.u32 %v3069, 7
      %v3071 = vsub.s32 %v3068, %v3070
      %v3072 = vrot.slane %v3058, %v3071
      %v3073 = vcombine.low %v3065, %v3072
      %v3074 = vcombine.low %v2659, %v2660
      %v3075 = vcombine.low %v2661, %v2662
      %v3076 = vcombine.low %v2663, %v2664
      %v3077 = vcombine.low %v2665, %v2666
      %v3079 = vunpack.c.l.s4 1966171168
      %v3080 = vunpack.c.0.s8 %v3079
      %v3081 = vlaneseq
      %v3082 = vshrl.u32 %v3081, 7
      %v3083 = vsub.s32 %v3080, %v3082
      %v3084 = vrot.slane %v3074, %v3083
      %v3086 = vunpack.c.l.s4 1966171168
      %v3087 = vunpack.c.0.s8 %v3086
      %v3088 = vlaneseq
      %v3089 = vshrl.u32 %v3088, 7
      %v3090 = vsub.s32 %v3087, %v3089
      %v3091 = vrot.slane %v3075, %v3090
      %v3093 = vunpack.c.l.s4 1966171168
      %v3094 = vunpack.c.0.s8 %v3093
      %v3095 = vlaneseq
      %v3096 = vshrl.u32 %v3095, 7
      %v3097 = vsub.s32 %v3094, %v3096
      %v3098 = vrot.slane %v3076, %v3097
      %v3100 = vunpack.c.l.s4 1966171168
      %v3101 = vunpack.c.0.s8 %v3100
      %v3102 = vlaneseq
      %v3103 = vshrl.u32 %v3102, 7
      %v3104 = vsub.s32 %v3101, %v3103
      %v3105 = vrot.slane %v3077, %v3104
      %v3106 = vcombine.low %v3084, %v3091
      %v3107 = vcombine.low %v3098, %v3105
      %v3109 = vunpack.c.l.s4 1966171168
      %v3110 = vunpack.c.0.s8 %v3109
      %v3111 = vlaneseq
      %v3112 = vshrl.u32 %v3111, 7
      %v3113 = vsub.s32 %v3110, %v3112
      %v3114 = vrot.slane %v3106, %v3113
      %v3116 = vunpack.c.l.s4 1966171168
      %v3117 = vunpack.c.0.s8 %v3116
      %v3118 = vlaneseq
      %v3119 = vshrl.u32 %v3118, 7
      %v3120 = vsub.s32 %v3117, %v3119
      %v3121 = vrot.slane %v3107, %v3120
      %v3122 = vcombine.low %v3114, %v3121
      %3131 = vst [vmem:[%s238] sm:$0xff] %v2779
      %3132 = vst [vmem:[%s238 + $0x8] sm:$0xff] %v2828
      %3133 = vst [vmem:[%s238 + $0x10] sm:$0xff] %v2877
      %3134 = vst [vmem:[%s238 + $0x18] sm:$0xff] %v2926
      %3135 = vst [vmem:[%s238 + $0x20] sm:$0xff] %v2975
      %3136 = vst [vmem:[%s238 + $0x28] sm:$0xff] %v3024
      %3137 = vst [vmem:[%s238 + $0x30] sm:$0xff] %v3073
      %3138 = vst [vmem:[%s238 + $0x38] sm:$0xff] %v3122
      %s3139 = smul.u32 8, %s20
      %p3140 = scmp.lt.s32.totalorder %s19, 1
      %s3141 = scalar_select %p3140, %s19, 1
      %p3142 = scmp.lt.s32.totalorder %s3139, 7
      %s3143 = scalar_select %p3142, %s3139, 7
      %s3144 = smul.addr %s3141, 8
      %s3145 = sadd.s32 %s3143, %s3144
      %s3146 = smul.addr %s3145, 8
      %s3147 = scalar_lea.vmem %s4, %s3146
      // Predicated region
      $region37: #{downsample_conv.1} parent=35 // pred_check
        %p3148 = pneg %p138
      $region38: #{downsample_conv.1} parent=35 // pred_check_branch
        %3150 = sbr.rel (%p3148) target = $region40
      $region39: #{downsample_conv.1} parent=35 // pred_region
        %s3151 = smul.u32 8, %s20
      $region40: #{downsample_conv.1} parent=35 // pred_fallthru
        _
    $region36: #{downsample_conv.1} parent=5 // pred_fallthru
      _
    %p3152 = scmp.le.s32.totalorder 2, %s10
    // Predicated region
    $region41: #{downsample_conv.1} parent=5 // pred_check
      %p3153 = pneg %p3152
    $region42: #{downsample_conv.1} parent=5 // pred_check_branch
      %3155 = sbr.rel (%p3153) target = $region44
    $region43: #{downsample_conv.1} parent=5 // pred_region
      %s3156 = ssub.s32 %s10, 2
      // Predicated region
      $region45: #{downsample_conv.1} parent=43 // pred_check
        %p3157 = pneg %p144
      $region46: #{downsample_conv.1} parent=43 // pred_check_branch
        %3159 = sbr.rel (%p3157) target = $region48
      $region47: #{downsample_conv.1} parent=43 // pred_region
        %s3160 = smul.u32 8, %s22
        %p3161 = scmp.lt.s32.totalorder %s21, 1
        %s3162 = scalar_select %p3161, %s21, 1
        %p3163 = scmp.lt.s32.totalorder %s3160, 7
        %s3164 = scalar_select %p3163, %s3160, 7
        %s3165 = smul.addr %s3162, 8
        %s3166 = sadd.s32 %s3164, %s3165
        %s3167 = smul.addr %s3166, 8
        %s3168 = scalar_lea.vmem %s4, %s3167
      $region48: #{downsample_conv.1} parent=43 // pred_fallthru
        _
    $region44: #{downsample_conv.1} parent=5 // pred_fallthru
      _
  $region6: #{downsample_conv.1} parent=0 // loop_footer
    %s14 = sadd.s32 1, %s10
  $region7: #{downsample_conv.1} parent=0 // loop_footer_branch
    %9 = sbr.rel target = $region3
  $region8: #{downsample_conv.1} parent=0 // loop_exit
    _

</llo_original>
